<compile_context>
chip_gen: v7x
topology: tpu7x:2x2x1
jax: 0.10.0
libtpu: 0.0.40
codegen_flags: <defaults>
</compile_context>

<pallas_src>
import jax
import jax.numpy as jnp
from jax.experimental import pallas as pl
from jax.experimental.pallas import tpu as pltpu

H = 28 * 28   # 784
O = 10
O_PAD = 128   # lane-dense output width written by the kernel
TM_MAX = 512  # batch-tile cap: keeps VMEM <~9 MB (safe even on v5e's 16 MiB
              # default scoped limit) while cutting per-step overhead 2x vs 256


def _round_up(n, m):
    return ((n + m - 1) // m) * m


def _choose_tile(B):
    """Batch tile: >=2 grid steps when B allows (v7x megacore), 16-row granule
    (bf16 sublane packing), 256-multiples capped at TM_MAX for large B."""
    if B <= 32:
        return _round_up(max(B, 1), 16)
    tm = _round_up(-(-B // 2), 16)            # ceil(B/2), 16-row granule
    if tm > 256:
        tm = min(TM_MAX, _round_up(tm, 256))
    return tm


def _mlp_kernel(x_ref, w1_ref, b1_ref, w2_ref, b2_ref, o_ref):
    # x_ref : (TM, 784) f32      w1_ref: (784, 784) bf16   b1_ref: (1, 784) f32
    # w2_ref: (784, 128) bf16    b2_ref: (1, 128) f32      o_ref : (TM, 128) bf16
    x = x_ref[...].astype(jnp.bfloat16)       # VPU cast; HBM read stays 4 B/elem
    # Layer 1: Linear(784 -> 784) + ReLU  (bf16 MXU matmul, f32 accumulation)
    h = jnp.dot(x, w1_ref[...], preferred_element_type=jnp.float32)
    h = jnp.maximum(h + b1_ref[...], 0.0)
    # Layer 2: Linear(784 -> 10) written into a 128-lane padded bf16 tile
    out = jnp.dot(h.astype(jnp.bfloat16), w2_ref[...],
                  preferred_element_type=jnp.float32)
    o_ref[...] = (out + b2_ref[...]).astype(o_ref.dtype)


def prepare_params(w1, b1, w2, b2):
    """One-time weight prep (run once at init, NOT per forward call).

    w1: (784, 784), w2: (784, 10)  -- (in, out), i.e. transposed vs. nn.Linear.
    b1: (784,), b2: (10,).
    Returns bf16 weights with w2/b2 pre-padded to the kernel's 128-lane tile.
    """
    w1_bf = w1.astype(jnp.bfloat16)                                       # (784, 784)
    b1_2d = b1.reshape(1, H).astype(jnp.float32)                          # (1, 784)
    w2_bf = jnp.pad(w2.astype(jnp.bfloat16), ((0, 0), (0, O_PAD - O)))    # (784, 128)
    b2_2d = jnp.pad(b2.reshape(1, O).astype(jnp.float32),
                    ((0, 0), (0, O_PAD - O)))                             # (1, 128)
    return w1_bf, b1_2d, w2_bf, b2_2d


def predictor_forward(x, w1_bf, b1_2d, w2_bf, b2_2d):
    """x: any shape reshapeable to (-1, 784), f32. Returns (B, 10) f32 logits.

    Weights must come from `prepare_params` (bf16, padded) so the per-call path
    contains no cast/pad ops -- only the Pallas kernel plus a tiny output slice.
    """
    x2d = x.reshape(-1, H)
    B = x2d.shape[0]
    TM = _choose_tile(B)

    out = pl.pallas_call(
        _mlp_kernel,
        out_shape=jax.ShapeDtypeStruct((B, O_PAD), jnp.bfloat16),
        grid=(pl.cdiv(B, TM),),
        in_specs=[
            pl.BlockSpec((TM, H), lambda i: (i, 0)),      # x tile (pipelined, ragged tail ok)
            pl.BlockSpec((H, H), lambda i: (0, 0)),       # w1 (constant block)
            pl.BlockSpec((1, H), lambda i: (0, 0)),       # b1
            pl.BlockSpec((H, O_PAD), lambda i: (0, 0)),   # w2 (pre-padded)
            pl.BlockSpec((1, O_PAD), lambda i: (0, 0)),   # b2 (pre-padded)
        ],
        out_specs=pl.BlockSpec((TM, O_PAD), lambda i: (i, 0)),
        compiler_params=pltpu.CompilerParams(
            dimension_semantics=("parallel",),
        ),
    )(x2d, w1_bf, b1_2d, w2_bf, b2_2d)

    return out[:, :O].astype(jnp.float32)


def init_params(key):
    """Deterministic init mirroring nn.Linear shapes (weights stored (in, out))."""
    k1, k2, k3, k4 = jax.random.split(key, 4)
    bound = 1.0 / jnp.sqrt(H)
    w1 = jax.random.uniform(k1, (H, H), jnp.float32, -bound, bound)
    b1 = jax.random.uniform(k2, (H,), jnp.float32, -bound, bound)
    w2 = jax.random.uniform(k3, (H, O), jnp.float32, -bound, bound)
    b2 = jax.random.uniform(k4, (O,), jnp.float32, -bound, bound)
    return w1, b1, w2, b2


if __name__ == "__main__":
    key = jax.random.PRNGKey(0)
    pkey, xkey = jax.random.split(key)
    w1, b1, w2, b2 = init_params(pkey)

    # One-time weight prep (outside the per-call path).
    params = prepare_params(w1, b1, w2, b2)

    forward = jax.jit(predictor_forward)

    # Small MNIST-like batch: (B, 1, 28, 28), flattened to (B, 784) inside.
    B = 8
    x = jax.random.normal(xkey, (B, 1, 28, 28), jnp.float32)

    logits = forward(x, *params)
    logits = jax.block_until_ready(logits)

    # Reference in plain JAX, mirroring the kernel's bf16 rounding points.
    x2d = x.reshape(-1, H).astype(jnp.bfloat16).astype(jnp.float32)
    w1f = w1.astype(jnp.bfloat16).astype(jnp.float32)
    w2f = w2.astype(jnp.bfloat16).astype(jnp.float32)
    h_ref = jnp.maximum(x2d @ w1f + b1, 0.0)
    ref = h_ref.astype(jnp.bfloat16).astype(jnp.float32) @ w2f + b2
    ref = ref.astype(jnp.bfloat16).astype(jnp.float32)   # kernel stores bf16 logits

    assert logits.shape == (B, O)
    assert jnp.allclose(logits, ref, atol=1e-2, rtol=1e-2)

    print("KERNEL_OK")
</pallas_src>

<mosaic_0001>
module attributes {stable_mosaic.version = 11 : i64} {
  func.func @_mlp_kernel(%arg0: i32, %arg1: memref<16x784xf32, #tpu.memory_space<vmem>>, %arg2: memref<784x784xbf16, #tpu.memory_space<vmem>>, %arg3: memref<1x784xf32, #tpu.memory_space<vmem>>, %arg4: memref<784x128xbf16, #tpu.memory_space<vmem>>, %arg5: memref<1x128xf32, #tpu.memory_space<vmem>>, %arg6: memref<16x128xbf16, #tpu.memory_space<vmem>>) attributes {dimension_semantics = [#tpu.dimension_semantics<parallel>], iteration_bounds = array<i64: 1>, scalar_prefetch = 0 : i64, scratch_operands = 0 : i64, tpu.core_type = #tpu.core_type<tc>, window_params = [{transform_indices = @transform_0, window_bounds = array<i64: 16, 784>}, {pipeline_mode = #tpu.pipeline_mode<synchronous>, transform_indices = @transform_1, window_bounds = array<i64: 784, 784>}, {pipeline_mode = #tpu.pipeline_mode<synchronous>, transform_indices = @transform_2, window_bounds = array<i64: 1, 784>}, {pipeline_mode = #tpu.pipeline_mode<synchronous>, transform_indices = @transform_3, window_bounds = array<i64: 784, 128>}, {pipeline_mode = #tpu.pipeline_mode<synchronous>, transform_indices = @transform_4, window_bounds = array<i64: 1, 128>}, {transform_indices = @transform_5, window_bounds = array<i64: 16, 128>}]} {
    %c0 = arith.constant 0 : index
    %c0_0 = arith.constant 0 : index
    %0 = vector.load %arg1[%c0, %c0_0] : memref<16x784xf32, #tpu.memory_space<vmem>>, vector<16x784xf32>
    %1 = arith.truncf %0 : vector<16x784xf32> to vector<16x784xbf16>
    %c0_1 = arith.constant 0 : index
    %c0_2 = arith.constant 0 : index
    %2 = vector.load %arg2[%c0_1, %c0_2] : memref<784x784xbf16, #tpu.memory_space<vmem>>, vector<784x784xbf16>
    %cst = arith.constant dense<0.000000e+00> : vector<16x784xf32>
    %3 = tpu.matmul %1, %2, %cst {dimension_numbers = #tpu.dot_dimension_numbers<[1], [0], [0], [1], [0, 0, 1, 1], [], []>} : vector<16x784xbf16>, vector<784x784xbf16>, vector<16x784xf32> -> vector<16x784xf32>
    %c0_3 = arith.constant 0 : index
    %c0_4 = arith.constant 0 : index
    %4 = vector.load %arg3[%c0_3, %c0_4] : memref<1x784xf32, #tpu.memory_space<vmem>>, vector<1x784xf32>
    %5 = vector.broadcast %4 : vector<1x784xf32> to vector<16x784xf32>
    %6 = arith.addf %3, %5 : vector<16x784xf32>
    %cst_5 = arith.constant 0.000000e+00 : f32
    %7 = vector.broadcast %cst_5 : f32 to vector<16x784xf32>
    %8 = arith.maximumf %6, %7 : vector<16x784xf32>
    %9 = arith.truncf %8 : vector<16x784xf32> to vector<16x784xbf16>
    %c0_6 = arith.constant 0 : index
    %c0_7 = arith.constant 0 : index
    %10 = vector.load %arg4[%c0_6, %c0_7] : memref<784x128xbf16, #tpu.memory_space<vmem>>, vector<784x128xbf16>
    %cst_8 = arith.constant dense<0.000000e+00> : vector<16x128xf32>
    %11 = tpu.matmul %9, %10, %cst_8 {dimension_numbers = #tpu.dot_dimension_numbers<[1], [0], [0], [1], [0, 0, 1, 1], [], []>} : vector<16x784xbf16>, vector<784x128xbf16>, vector<16x128xf32> -> vector<16x128xf32>
    %c0_9 = arith.constant 0 : index
    %c0_10 = arith.constant 0 : index
    %12 = vector.load %arg5[%c0_9, %c0_10] : memref<1x128xf32, #tpu.memory_space<vmem>>, vector<1x128xf32>
    %13 = vector.broadcast %12 : vector<1x128xf32> to vector<16x128xf32>
    %14 = arith.addf %11, %13 : vector<16x128xf32>
    %15 = arith.truncf %14 : vector<16x128xf32> to vector<16x128xbf16>
    %c0_11 = arith.constant 0 : index
    %c0_12 = arith.constant 0 : index
    %16 = vector.load %arg6[%c0_11, %c0_12] : memref<16x128xbf16, #tpu.memory_space<vmem>>, vector<16x128xbf16>
    tpu.vector_store %arg6[%c0_11, %c0_12], %15 {strides = array<i32>} : memref<16x128xbf16, #tpu.memory_space<vmem>>, vector<16x128xbf16>,
    return
  }
  func.func @transform_0(%arg0: i32) -> (i32, i32) {
    %c0_i32 = arith.constant 0 : i32
    %c0_i32_0 = arith.constant 0 : i32
    return %arg0, %c0_i32 : i32, i32
  }
  func.func @transform_1(%arg0: i32) -> (i32, i32) {
    %c0_i32 = arith.constant 0 : i32
    %c0_i32_0 = arith.constant 0 : i32
    %c0_i32_1 = arith.constant 0 : i32
    return %c0_i32, %c0_i32_0 : i32, i32
  }
  func.func @transform_2(%arg0: i32) -> (i32, i32) {
    %c0_i32 = arith.constant 0 : i32
    %c0_i32_0 = arith.constant 0 : i32
    %c0_i32_1 = arith.constant 0 : i32
    return %c0_i32, %c0_i32_0 : i32, i32
  }
  func.func @transform_3(%arg0: i32) -> (i32, i32) {
    %c0_i32 = arith.constant 0 : i32
    %c0_i32_0 = arith.constant 0 : i32
    %c0_i32_1 = arith.constant 0 : i32
    return %c0_i32, %c0_i32_0 : i32, i32
  }
  func.func @transform_4(%arg0: i32) -> (i32, i32) {
    %c0_i32 = arith.constant 0 : i32
    %c0_i32_0 = arith.constant 0 : i32
    %c0_i32_1 = arith.constant 0 : i32
    return %c0_i32, %c0_i32_0 : i32, i32
  }
  func.func @transform_5(%arg0: i32) -> (i32, i32) {
    %c0_i32 = arith.constant 0 : i32
    %c0_i32_0 = arith.constant 0 : i32
    return %arg0, %c0_i32 : i32, i32
  }
}

</mosaic_0001>

<llo_original>
// kernel: predictor_forward.1
$region0: #{predictor_forward.1}
  #allocation0 [shape = 'u32[]', space=smem, size = 0x4, offset = 0x4, fixed_abs, tag = 'smem constant byte address 0x4 - core index']
  #allocation1 [shape = 'u32[144,128]{1,0:T(1,128)}', space=vmem, size = 0x12000, scoped, tag = 'internal scratch']
  %s0 = inlined_call_operand.vmem [shape: f32[8,784], index: 0, kind: input, shape index: {}]
  %s1 = inlined_call_operand.hbm [shape: bf16[784,784], index: 1, kind: input, shape index: {}]
  %s2 = inlined_call_operand.hbm [shape: f32[1,784], index: 2, kind: input, shape index: {}]
  %s3 = inlined_call_operand.hbm [shape: bf16[784,128], index: 3, kind: input, shape index: {}]
  %s4 = inlined_call_operand.hbm [shape: f32[1,128], index: 4, kind: input, shape index: {}]
  %s5 = inlined_call_operand.vmem [shape: bf16[8,128], index: 5, kind: output, shape index: {}]
  %s6 = sld [smem:[#allocation0]]
  $region76: #{predictor_forward.1} parent=0
    _
  %s8 = ssub.s32 1, %s6
  %s9 = scalar_select 0, %s8, %s6
  $region1: #{predictor_forward.1} parent=0
    #allocation2 [shape = 'u8[1404928]{0}', space=vmem, size = 0x157000, scoped, tag = 'input window, operand 1, single buffered']
    #allocation3 [shape = 's32[1]{0}', space=sflag, size = 0x4, scoped, tag = 'scoped memory for predictor_forward.1']
    #allocation4 [shape = 'u8[3584]{0}', space=vmem, size = 0x1000, scoped, tag = 'input window, operand 2, single buffered']
    #allocation5 [shape = 's32[1]{0}', space=sflag, size = 0x4, scoped, tag = 'scoped memory for predictor_forward.1']
    #allocation6 [shape = 'u8[200704]{0}', space=vmem, size = 0x31000, scoped, tag = 'input window, operand 3, single buffered']
    #allocation7 [shape = 'u8[512]{0}', space=vmem, size = 0x400, scoped, tag = 'input window, operand 4, single buffered']
    #allocation8 [shape = 's32[1]{0}', space=sflag, size = 0x4, scoped, tag = 'scoped memory for predictor_forward.1']
    #allocation9 [shape = 'u8[4096]{0}', space=vmem, size = 0x1000, scoped, tag = 'output window, operand 0, single buffered']
    %10 = vsyncpa [#allocation3], 0
    %11 = vsyncpa [#allocation5], 0
    %12 = vsyncpa [#allocation8], 0
    // Predicated region
    $region2: #{predictor_forward.1} parent=1 // pred_check
      _
    $region3: #{predictor_forward.1} parent=1 // pred_check_branch
      %14 = sbr.rel (0) target = $region5
    $region4: #{predictor_forward.1} parent=1 // pred_region
      _
    $region5: #{predictor_forward.1} parent=1 // pred_fallthru
      _
    // Predicated region
    $region6: #{predictor_forward.1} parent=1 // pred_check
      _
    $region7: #{predictor_forward.1} parent=1 // pred_check_branch
      %16 = sbr.rel (0) target = $region9
    $region8: #{predictor_forward.1} parent=1 // pred_region
      %s18 = ssub.s32 43904, 43904
      %19 = vsyncadd [#allocation3], %s18
      %s20 = sshll.u32 [#allocation2], 4
      %s21 = int_to_ptr.vmem [resolvable:$true] %s20
      %26 = dma.hbm_to_vmem [thread:$0]  %s1, 43904, %s21, [#allocation3], 448, 448, 28
    $region9: #{predictor_forward.1} parent=1 // pred_fallthru
      _
    // Predicated region
    $region10: #{predictor_forward.1} parent=1 // pred_check
      _
    $region11: #{predictor_forward.1} parent=1 // pred_check_branch
      %28 = sbr.rel (0) target = $region13
    $region12: #{predictor_forward.1} parent=1 // pred_region
      %s30 = ssub.s32 112, 112
      %31 = vsyncadd [#allocation5], %s30
      %s33 = sshll.u32 [#allocation4], 4
      %s34 = int_to_ptr.vmem [resolvable:$true] %s33
      %36 = dma.hbm_to_vmem [thread:$0]  %s2, 112, %s34, [#allocation5]
    $region13: #{predictor_forward.1} parent=1 // pred_fallthru
      _
    // Predicated region
    $region14: #{predictor_forward.1} parent=1 // pred_check
      _
    $region15: #{predictor_forward.1} parent=1 // pred_check_branch
      %38 = sbr.rel (0) target = $region17
    $region16: #{predictor_forward.1} parent=1 // pred_region
      %s40 = ssub.s32 6272, 6272
      %41 = vsyncadd [#allocation5], %s40
      %s42 = sshll.u32 [#allocation6], 4
      %s43 = int_to_ptr.vmem [resolvable:$true] %s42
      %48 = dma.hbm_to_vmem [thread:$0]  %s3, 6272, %s43, [#allocation5], 64, 64, 4
    $region17: #{predictor_forward.1} parent=1 // pred_fallthru
      _
    // Predicated region
    $region18: #{predictor_forward.1} parent=1 // pred_check
      _
    $region19: #{predictor_forward.1} parent=1 // pred_check_branch
      %50 = sbr.rel (0) target = $region21
    $region20: #{predictor_forward.1} parent=1 // pred_region
      %s52 = ssub.s32 16, 16
      %53 = vsyncadd [#allocation8], %s52
      %s55 = sshll.u32 [#allocation7], 4
      %s56 = int_to_ptr.vmem [resolvable:$true] %s55
      %58 = dma.hbm_to_vmem [thread:$0]  %s4, 16, %s56, [#allocation8]
    $region21: #{predictor_forward.1} parent=1 // pred_fallthru
      _
    // Predicated region
    $region22: #{predictor_forward.1} parent=1 // pred_check
      _
    $region23: #{predictor_forward.1} parent=1 // pred_check_branch
      %60 = sbr.rel (0) target = $region25
    $region24: #{predictor_forward.1} parent=1 // pred_region
      %61 = dma.done [#allocation3], 43904
    $region25: #{predictor_forward.1} parent=1 // pred_fallthru
      _
    // Predicated region
    $region26: #{predictor_forward.1} parent=1 // pred_check
      _
    $region27: #{predictor_forward.1} parent=1 // pred_check_branch
      %63 = sbr.rel (0) target = $region29
    $region28: #{predictor_forward.1} parent=1 // pred_region
      %64 = dma.done [#allocation5], 112
    $region29: #{predictor_forward.1} parent=1 // pred_fallthru
      _
    // Predicated region
    $region30: #{predictor_forward.1} parent=1 // pred_check
      _
    $region31: #{predictor_forward.1} parent=1 // pred_check_branch
      %66 = sbr.rel (0) target = $region33
    $region32: #{predictor_forward.1} parent=1 // pred_region
      %67 = dma.done [#allocation5], 6272
    $region33: #{predictor_forward.1} parent=1 // pred_fallthru
      _
    // Predicated region
    $region34: #{predictor_forward.1} parent=1 // pred_check
      _
    $region35: #{predictor_forward.1} parent=1 // pred_check_branch
      %69 = sbr.rel (0) target = $region37
    $region36: #{predictor_forward.1} parent=1 // pred_region
      %70 = dma.done [#allocation8], 16
    $region37: #{predictor_forward.1} parent=1 // pred_fallthru
      _
    %v72 = vld [vmem:[%s0] sm:$0xff]
    %v73 = vld [vmem:[%s0 + $0x8] sm:$0xff]
    %v74 = vld [vmem:[%s0 + $0x10] sm:$0xff]
    %v75 = vld [vmem:[%s0 + $0x18] sm:$0xff]
    %v76 = vld [vmem:[%s0 + $0x20] sm:$0xff]
    %v77 = vld [vmem:[%s0 + $0x28] sm:$0xff]
    %v78 = vld [vmem:[%s0 + $0x30] sm:$0xff]
    %v79 = vld [vmem:[%s0 + $0x38] sm:$0xff]
    %v80 = vld [vmem:[%s0 + $0x40] sm:$0xff]
    %v81 = vld [vmem:[%s0 + $0x48] sm:$0xff]
    %v82 = vld [vmem:[%s0 + $0x50] sm:$0xff]
    %v83 = vld [vmem:[%s0 + $0x58] sm:$0xff]
    %v84 = vld [vmem:[%s0 + $0x60] sm:$0xff]
    %v85 = vld [vmem:[%s0 + $0x68] sm:$0xff]
    %v86 = vpack.c.bf16 %v79, %v72
    %v87 = vpack.c.bf16 %v80, %v73
    %v88 = vpack.c.bf16 %v81, %v74
    %v89 = vpack.c.bf16 %v82, %v75
    %v90 = vpack.c.bf16 %v83, %v76
    %v91 = vpack.c.bf16 %v84, %v77
    %v92 = vpack.c.bf16 %v85, %v78
    %v93 = vld [vmem:[#allocation2] sm:$0xff]
    %v94 = vld [vmem:[#allocation2 + $0x8] sm:$0xff]
    %v95 = vld [vmem:[#allocation2 + $0x10] sm:$0xff]
    %v96 = vld [vmem:[#allocation2 + $0x18] sm:$0xf]
    %v97 = vld [vmem:[#allocation2 + $0x1c] sm:$0xff]
    %v98 = vld [vmem:[#allocation2 + $0x24] sm:$0xff]
    %v99 = vld [vmem:[#allocation2 + $0x2c] sm:$0xff]
    %v100 = vld [vmem:[#allocation2 + $0x34] sm:$0xf]
    %v101 = vld [vmem:[#allocation2 + $0x38] sm:$0xff]
    %v102 = vld [vmem:[#allocation2 + $0x40] sm:$0xff]
    %v103 = vld [vmem:[#allocation2 + $0x48] sm:$0xff]
    %v104 = vld [vmem:[#allocation2 + $0x50] sm:$0xf]
    %v105 = vld [vmem:[#allocation2 + $0x54] sm:$0xff]
    %v106 = vld [vmem:[#allocation2 + $0x5c] sm:$0xff]
    %v107 = vld [vmem:[#allocation2 + $0x64] sm:$0xff]
    %v108 = vld [vmem:[#allocation2 + $0x6c] sm:$0xf]
    %v109 = vld [vmem:[#allocation2 + $0x70] sm:$0xff]
    %v110 = vld [vmem:[#allocation2 + $0x78] sm:$0xff]
    %v111 = vld [vmem:[#allocation2 + $0x80] sm:$0xff]
    %v112 = vld [vmem:[#allocation2 + $0x88] sm:$0xf]
    %v113 = vld [vmem:[#allocation2 + $0x8c] sm:$0xff]
    %v114 = vld [vmem:[#allocation2 + $0x94] sm:$0xff]
    %v115 = vld [vmem:[#allocation2 + $0x9c] sm:$0xff]
    %v116 = vld [vmem:[#allocation2 + $0xa4] sm:$0xf]
    %v117 = vld [vmem:[#allocation2 + $0xa8] sm:$0xff]
    %v118 = vld [vmem:[#allocation2 + $0xb0] sm:$0xff]
    %v119 = vld [vmem:[#allocation2 + $0xb8] sm:$0xff]
    %v120 = vld [vmem:[#allocation2 + $0xc0] sm:$0xf]
    %v121 = vld [vmem:[#allocation2 + $0xc4] sm:$0xff]
    %v122 = vld [vmem:[#allocation2 + $0xcc] sm:$0xff]
    %v123 = vld [vmem:[#allocation2 + $0xd4] sm:$0xff]
    %v124 = vld [vmem:[#allocation2 + $0xdc] sm:$0xf]
    %v125 = vld [vmem:[#allocation2 + $0xe0] sm:$0xff]
    %v126 = vld [vmem:[#allocation2 + $0xe8] sm:$0xff]
    %v127 = vld [vmem:[#allocation2 + $0xf0] sm:$0xff]
    %v128 = vld [vmem:[#allocation2 + $0xf8] sm:$0xf]
    %v129 = vld [vmem:[#allocation2 + $0xfc] sm:$0xff]
    %v130 = vld [vmem:[#allocation2 + $0x104] sm:$0xff]
    %v131 = vld [vmem:[#allocation2 + $0x10c] sm:$0xff]
    %v132 = vld [vmem:[#allocation2 + $0x114] sm:$0xf]
    %v133 = vld [vmem:[#allocation2 + $0x118] sm:$0xff]
    %v134 = vld [vmem:[#allocation2 + $0x120] sm:$0xff]
    %v135 = vld [vmem:[#allocation2 + $0x128] sm:$0xff]
    %v136 = vld [vmem:[#allocation2 + $0x130] sm:$0xf]
    %v137 = vld [vmem:[#allocation2 + $0x134] sm:$0xff]
    %v138 = vld [vmem:[#allocation2 + $0x13c] sm:$0xff]
    %v139 = vld [vmem:[#allocation2 + $0x144] sm:$0xff]
    %v140 = vld [vmem:[#allocation2 + $0x14c] sm:$0xf]
    %v141 = vld [vmem:[#allocation2 + $0x150] sm:$0xff]
    %v142 = vld [vmem:[#allocation2 + $0x158] sm:$0xff]
    %v143 = vld [vmem:[#allocation2 + $0x160] sm:$0xff]
    %v144 = vld [vmem:[#allocation2 + $0x168] sm:$0xf]
    %v145 = vld [vmem:[#allocation2 + $0x16c] sm:$0xff]
    %v146 = vld [vmem:[#allocation2 + $0x174] sm:$0xff]
    %v147 = vld [vmem:[#allocation2 + $0x17c] sm:$0xff]
    %v148 = vld [vmem:[#allocation2 + $0x184] sm:$0xf]
    %v149 = vld [vmem:[#allocation2 + $0x188] sm:$0xff]
    %v150 = vld [vmem:[#allocation2 + $0x190] sm:$0xff]
    %v151 = vld [vmem:[#allocation2 + $0x198] sm:$0xff]
    %v152 = vld [vmem:[#allocation2 + $0x1a0] sm:$0xf]
    %v153 = vld [vmem:[#allocation2 + $0x1a4] sm:$0xff]
    %v154 = vld [vmem:[#allocation2 + $0x1ac] sm:$0xff]
    %v155 = vld [vmem:[#allocation2 + $0x1b4] sm:$0xff]
    %v156 = vld [vmem:[#allocation2 + $0x1bc] sm:$0xf]
    %v157 = vld [vmem:[#allocation2 + $0x1c0] sm:$0xff]
    %v158 = vld [vmem:[#allocation2 + $0x1c8] sm:$0xff]
    %v159 = vld [vmem:[#allocation2 + $0x1d0] sm:$0xff]
    %v160 = vld [vmem:[#allocation2 + $0x1d8] sm:$0xf]
    %v161 = vld [vmem:[#allocation2 + $0x1dc] sm:$0xff]
    %v162 = vld [vmem:[#allocation2 + $0x1e4] sm:$0xff]
    %v163 = vld [vmem:[#allocation2 + $0x1ec] sm:$0xff]
    %v164 = vld [vmem:[#allocation2 + $0x1f4] sm:$0xf]
    %v165 = vld [vmem:[#allocation2 + $0x1f8] sm:$0xff]
    %v166 = vld [vmem:[#allocation2 + $0x200] sm:$0xff]
    %v167 = vld [vmem:[#allocation2 + $0x208] sm:$0xff]
    %v168 = vld [vmem:[#allocation2 + $0x210] sm:$0xf]
    %v169 = vld [vmem:[#allocation2 + $0x214] sm:$0xff]
    %v170 = vld [vmem:[#allocation2 + $0x21c] sm:$0xff]
    %v171 = vld [vmem:[#allocation2 + $0x224] sm:$0xff]
    %v172 = vld [vmem:[#allocation2 + $0x22c] sm:$0xf]
    %v173 = vld [vmem:[#allocation2 + $0x230] sm:$0xff]
    %v174 = vld [vmem:[#allocation2 + $0x238] sm:$0xff]
    %v175 = vld [vmem:[#allocation2 + $0x240] sm:$0xff]
    %v176 = vld [vmem:[#allocation2 + $0x248] sm:$0xf]
    %v177 = vld [vmem:[#allocation2 + $0x24c] sm:$0xff]
    %v178 = vld [vmem:[#allocation2 + $0x254] sm:$0xff]
    %v179 = vld [vmem:[#allocation2 + $0x25c] sm:$0xff]
    %v180 = vld [vmem:[#allocation2 + $0x264] sm:$0xf]
    %v181 = vld [vmem:[#allocation2 + $0x268] sm:$0xff]
    %v182 = vld [vmem:[#allocation2 + $0x270] sm:$0xff]
    %v183 = vld [vmem:[#allocation2 + $0x278] sm:$0xff]
    %v184 = vld [vmem:[#allocation2 + $0x280] sm:$0xf]
    %v185 = vld [vmem:[#allocation2 + $0x284] sm:$0xff]
    %v186 = vld [vmem:[#allocation2 + $0x28c] sm:$0xff]
    %v187 = vld [vmem:[#allocation2 + $0x294] sm:$0xff]
    %v188 = vld [vmem:[#allocation2 + $0x29c] sm:$0xf]
    %v189 = vld [vmem:[#allocation2 + $0x2a0] sm:$0xff]
    %v190 = vld [vmem:[#allocation2 + $0x2a8] sm:$0xff]
    %v191 = vld [vmem:[#allocation2 + $0x2b0] sm:$0xff]
    %v192 = vld [vmem:[#allocation2 + $0x2b8] sm:$0xf]
    %v193 = vld [vmem:[#allocation2 + $0x2bc] sm:$0xff]
    %v194 = vld [vmem:[#allocation2 + $0x2c4] sm:$0xff]
    %v195 = vld [vmem:[#allocation2 + $0x2cc] sm:$0xff]
    %v196 = vld [vmem:[#allocation2 + $0x2d4] sm:$0xf]
    %v197 = vld [vmem:[#allocation2 + $0x2d8] sm:$0xff]
    %v198 = vld [vmem:[#allocation2 + $0x2e0] sm:$0xff]
    %v199 = vld [vmem:[#allocation2 + $0x2e8] sm:$0xff]
    %v200 = vld [vmem:[#allocation2 + $0x2f0] sm:$0xf]
    %v201 = vld [vmem:[#allocation2 + $0x2f4] sm:$0xff]
    %v202 = vld [vmem:[#allocation2 + $0x2fc] sm:$0xff]
    %v203 = vld [vmem:[#allocation2 + $0x304] sm:$0xff]
    %v204 = vld [vmem:[#allocation2 + $0x30c] sm:$0xf]
    %v205 = vld [vmem:[#allocation2 + $0x310] sm:$0xff]
    %v206 = vld [vmem:[#allocation2 + $0x318] sm:$0xff]
    %v207 = vld [vmem:[#allocation2 + $0x320] sm:$0xff]
    %v208 = vld [vmem:[#allocation2 + $0x328] sm:$0xf]
    %v209 = vld [vmem:[#allocation2 + $0x32c] sm:$0xff]
    %v210 = vld [vmem:[#allocation2 + $0x334] sm:$0xff]
    %v211 = vld [vmem:[#allocation2 + $0x33c] sm:$0xff]
    %v212 = vld [vmem:[#allocation2 + $0x344] sm:$0xf]
    %v213 = vld [vmem:[#allocation2 + $0x348] sm:$0xff]
    %v214 = vld [vmem:[#allocation2 + $0x350] sm:$0xff]
    %v215 = vld [vmem:[#allocation2 + $0x358] sm:$0xff]
    %v216 = vld [vmem:[#allocation2 + $0x360] sm:$0xf]
    %v217 = vld [vmem:[#allocation2 + $0x364] sm:$0xff]
    %v218 = vld [vmem:[#allocation2 + $0x36c] sm:$0xff]
    %v219 = vld [vmem:[#allocation2 + $0x374] sm:$0xff]
    %v220 = vld [vmem:[#allocation2 + $0x37c] sm:$0xf]
    %v221 = vld [vmem:[#allocation2 + $0x380] sm:$0xff]
    %v222 = vld [vmem:[#allocation2 + $0x388] sm:$0xff]
    %v223 = vld [vmem:[#allocation2 + $0x390] sm:$0xff]
    %v224 = vld [vmem:[#allocation2 + $0x398] sm:$0xf]
    %v225 = vld [vmem:[#allocation2 + $0x39c] sm:$0xff]
    %v226 = vld [vmem:[#allocation2 + $0x3a4] sm:$0xff]
    %v227 = vld [vmem:[#allocation2 + $0x3ac] sm:$0xff]
    %v228 = vld [vmem:[#allocation2 + $0x3b4] sm:$0xf]
    %v229 = vld [vmem:[#allocation2 + $0x3b8] sm:$0xff]
    %v230 = vld [vmem:[#allocation2 + $0x3c0] sm:$0xff]
    %v231 = vld [vmem:[#allocation2 + $0x3c8] sm:$0xff]
    %v232 = vld [vmem:[#allocation2 + $0x3d0] sm:$0xf]
    %v233 = vld [vmem:[#allocation2 + $0x3d4] sm:$0xff]
    %v234 = vld [vmem:[#allocation2 + $0x3dc] sm:$0xff]
    %v235 = vld [vmem:[#allocation2 + $0x3e4] sm:$0xff]
    %v236 = vld [vmem:[#allocation2 + $0x3ec] sm:$0xf]
    %v237 = vld [vmem:[#allocation2 + $0x3f0] sm:$0xff]
    %v238 = vld [vmem:[#allocation2 + $0x3f8] sm:$0xff]
    %v239 = vld [vmem:[#allocation2 + $0x400] sm:$0xff]
    %v240 = vld [vmem:[#allocation2 + $0x408] sm:$0xf]
    %v241 = vld [vmem:[#allocation2 + $0x40c] sm:$0xff]
    %v242 = vld [vmem:[#allocation2 + $0x414] sm:$0xff]
    %v243 = vld [vmem:[#allocation2 + $0x41c] sm:$0xff]
    %v244 = vld [vmem:[#allocation2 + $0x424] sm:$0xf]
    %v245 = vld [vmem:[#allocation2 + $0x428] sm:$0xff]
    %v246 = vld [vmem:[#allocation2 + $0x430] sm:$0xff]
    %v247 = vld [vmem:[#allocation2 + $0x438] sm:$0xff]
    %v248 = vld [vmem:[#allocation2 + $0x440] sm:$0xf]
    %v249 = vld [vmem:[#allocation2 + $0x444] sm:$0xff]
    %v250 = vld [vmem:[#allocation2 + $0x44c] sm:$0xff]
    %v251 = vld [vmem:[#allocation2 + $0x454] sm:$0xff]
    %v252 = vld [vmem:[#allocation2 + $0x45c] sm:$0xf]
    %v253 = vld [vmem:[#allocation2 + $0x460] sm:$0xff]
    %v254 = vld [vmem:[#allocation2 + $0x468] sm:$0xff]
    %v255 = vld [vmem:[#allocation2 + $0x470] sm:$0xff]
    %v256 = vld [vmem:[#allocation2 + $0x478] sm:$0xf]
    %v257 = vld [vmem:[#allocation2 + $0x47c] sm:$0xff]
    %v258 = vld [vmem:[#allocation2 + $0x484] sm:$0xff]
    %v259 = vld [vmem:[#allocation2 + $0x48c] sm:$0xff]
    %v260 = vld [vmem:[#allocation2 + $0x494] sm:$0xf]
    %v261 = vld [vmem:[#allocation2 + $0x498] sm:$0xff]
    %v262 = vld [vmem:[#allocation2 + $0x4a0] sm:$0xff]
    %v263 = vld [vmem:[#allocation2 + $0x4a8] sm:$0xff]
    %v264 = vld [vmem:[#allocation2 + $0x4b0] sm:$0xf]
    %v265 = vld [vmem:[#allocation2 + $0x4b4] sm:$0xff]
    %v266 = vld [vmem:[#allocation2 + $0x4bc] sm:$0xff]
    %v267 = vld [vmem:[#allocation2 + $0x4c4] sm:$0xff]
    %v268 = vld [vmem:[#allocation2 + $0x4cc] sm:$0xf]
    %v269 = vld [vmem:[#allocation2 + $0x4d0] sm:$0xff]
    %v270 = vld [vmem:[#allocation2 + $0x4d8] sm:$0xff]
    %v271 = vld [vmem:[#allocation2 + $0x4e0] sm:$0xff]
    %v272 = vld [vmem:[#allocation2 + $0x4e8] sm:$0xf]
    %v273 = vld [vmem:[#allocation2 + $0x4ec] sm:$0xff]
    %v274 = vld [vmem:[#allocation2 + $0x4f4] sm:$0xff]
    %v275 = vld [vmem:[#allocation2 + $0x4fc] sm:$0xff]
    %v276 = vld [vmem:[#allocation2 + $0x504] sm:$0xf]
    %v277 = vld [vmem:[#allocation2 + $0x508] sm:$0xff]
    %v278 = vld [vmem:[#allocation2 + $0x510] sm:$0xff]
    %v279 = vld [vmem:[#allocation2 + $0x518] sm:$0xff]
    %v280 = vld [vmem:[#allocation2 + $0x520] sm:$0xf]
    %v281 = vld [vmem:[#allocation2 + $0x524] sm:$0xff]
    %v282 = vld [vmem:[#allocation2 + $0x52c] sm:$0xff]
    %v283 = vld [vmem:[#allocation2 + $0x534] sm:$0xff]
    %v284 = vld [vmem:[#allocation2 + $0x53c] sm:$0xf]
    %v285 = vld [vmem:[#allocation2 + $0x540] sm:$0xff]
    %v286 = vld [vmem:[#allocation2 + $0x548] sm:$0xff]
    %v287 = vld [vmem:[#allocation2 + $0x550] sm:$0xff]
    %v288 = vld [vmem:[#allocation2 + $0x558] sm:$0xf]
    %v289 = vld [vmem:[#allocation2 + $0x55c] sm:$0xff]
    %v290 = vld [vmem:[#allocation2 + $0x564] sm:$0xff]
    %v291 = vld [vmem:[#allocation2 + $0x56c] sm:$0xff]
    %v292 = vld [vmem:[#allocation2 + $0x574] sm:$0xf]
    %v293 = vld [vmem:[#allocation2 + $0x578] sm:$0xff]
    %v294 = vld [vmem:[#allocation2 + $0x580] sm:$0xff]
    %v295 = vld [vmem:[#allocation2 + $0x588] sm:$0xff]
    %v296 = vld [vmem:[#allocation2 + $0x590] sm:$0xf]
    %v297 = vld [vmem:[#allocation2 + $0x594] sm:$0xff]
    %v298 = vld [vmem:[#allocation2 + $0x59c] sm:$0xff]
    %v299 = vld [vmem:[#allocation2 + $0x5a4] sm:$0xff]
    %v300 = vld [vmem:[#allocation2 + $0x5ac] sm:$0xf]
    %v301 = vld [vmem:[#allocation2 + $0x5b0] sm:$0xff]
    %v302 = vld [vmem:[#allocation2 + $0x5b8] sm:$0xff]
    %v303 = vld [vmem:[#allocation2 + $0x5c0] sm:$0xff]
    %v304 = vld [vmem:[#allocation2 + $0x5c8] sm:$0xf]
    %v305 = vld [vmem:[#allocation2 + $0x5cc] sm:$0xff]
    %v306 = vld [vmem:[#allocation2 + $0x5d4] sm:$0xff]
    %v307 = vld [vmem:[#allocation2 + $0x5dc] sm:$0xff]
    %v308 = vld [vmem:[#allocation2 + $0x5e4] sm:$0xf]
    %v309 = vld [vmem:[#allocation2 + $0x5e8] sm:$0xff]
    %v310 = vld [vmem:[#allocation2 + $0x5f0] sm:$0xff]
    %v311 = vld [vmem:[#allocation2 + $0x5f8] sm:$0xff]
    %v312 = vld [vmem:[#allocation2 + $0x600] sm:$0xf]
    %v313 = vld [vmem:[#allocation2 + $0x604] sm:$0xff]
    %v314 = vld [vmem:[#allocation2 + $0x60c] sm:$0xff]
    %v315 = vld [vmem:[#allocation2 + $0x614] sm:$0xff]
    %v316 = vld [vmem:[#allocation2 + $0x61c] sm:$0xf]
    %v317 = vld [vmem:[#allocation2 + $0x620] sm:$0xff]
    %v318 = vld [vmem:[#allocation2 + $0x628] sm:$0xff]
    %v319 = vld [vmem:[#allocation2 + $0x630] sm:$0xff]
    %v320 = vld [vmem:[#allocation2 + $0x638] sm:$0xf]
    %v321 = vld [vmem:[#allocation2 + $0x63c] sm:$0xff]
    %v322 = vld [vmem:[#allocation2 + $0x644] sm:$0xff]
    %v323 = vld [vmem:[#allocation2 + $0x64c] sm:$0xff]
    %v324 = vld [vmem:[#allocation2 + $0x654] sm:$0xf]
    %v325 = vld [vmem:[#allocation2 + $0x658] sm:$0xff]
    %v326 = vld [vmem:[#allocation2 + $0x660] sm:$0xff]
    %v327 = vld [vmem:[#allocation2 + $0x668] sm:$0xff]
    %v328 = vld [vmem:[#allocation2 + $0x670] sm:$0xf]
    %v329 = vld [vmem:[#allocation2 + $0x674] sm:$0xff]
    %v330 = vld [vmem:[#allocation2 + $0x67c] sm:$0xff]
    %v331 = vld [vmem:[#allocation2 + $0x684] sm:$0xff]
    %v332 = vld [vmem:[#allocation2 + $0x68c] sm:$0xf]
    %v333 = vld [vmem:[#allocation2 + $0x690] sm:$0xff]
    %v334 = vld [vmem:[#allocation2 + $0x698] sm:$0xff]
    %v335 = vld [vmem:[#allocation2 + $0x6a0] sm:$0xff]
    %v336 = vld [vmem:[#allocation2 + $0x6a8] sm:$0xf]
    %v337 = vld [vmem:[#allocation2 + $0x6ac] sm:$0xff]
    %v338 = vld [vmem:[#allocation2 + $0x6b4] sm:$0xff]
    %v339 = vld [vmem:[#allocation2 + $0x6bc] sm:$0xff]
    %v340 = vld [vmem:[#allocation2 + $0x6c4] sm:$0xf]
    %v341 = vld [vmem:[#allocation2 + $0x6c8] sm:$0xff]
    %v342 = vld [vmem:[#allocation2 + $0x6d0] sm:$0xff]
    %v343 = vld [vmem:[#allocation2 + $0x6d8] sm:$0xff]
    %v344 = vld [vmem:[#allocation2 + $0x6e0] sm:$0xf]
    %v345 = vld [vmem:[#allocation2 + $0x6e4] sm:$0xff]
    %v346 = vld [vmem:[#allocation2 + $0x6ec] sm:$0xff]
    %v347 = vld [vmem:[#allocation2 + $0x6f4] sm:$0xff]
    %v348 = vld [vmem:[#allocation2 + $0x6fc] sm:$0xf]
    %v349 = vld [vmem:[#allocation2 + $0x700] sm:$0xff]
    %v350 = vld [vmem:[#allocation2 + $0x708] sm:$0xff]
    %v351 = vld [vmem:[#allocation2 + $0x710] sm:$0xff]
    %v352 = vld [vmem:[#allocation2 + $0x718] sm:$0xf]
    %v353 = vld [vmem:[#allocation2 + $0x71c] sm:$0xff]
    %v354 = vld [vmem:[#allocation2 + $0x724] sm:$0xff]
    %v355 = vld [vmem:[#allocation2 + $0x72c] sm:$0xff]
    %v356 = vld [vmem:[#allocation2 + $0x734] sm:$0xf]
    %v357 = vld [vmem:[#allocation2 + $0x738] sm:$0xff]
    %v358 = vld [vmem:[#allocation2 + $0x740] sm:$0xff]
    %v359 = vld [vmem:[#allocation2 + $0x748] sm:$0xff]
    %v360 = vld [vmem:[#allocation2 + $0x750] sm:$0xf]
    %v361 = vld [vmem:[#allocation2 + $0x754] sm:$0xff]
    %v362 = vld [vmem:[#allocation2 + $0x75c] sm:$0xff]
    %v363 = vld [vmem:[#allocation2 + $0x764] sm:$0xff]
    %v364 = vld [vmem:[#allocation2 + $0x76c] sm:$0xf]
    %v365 = vld [vmem:[#allocation2 + $0x770] sm:$0xff]
    %v366 = vld [vmem:[#allocation2 + $0x778] sm:$0xff]
    %v367 = vld [vmem:[#allocation2 + $0x780] sm:$0xff]
    %v368 = vld [vmem:[#allocation2 + $0x788] sm:$0xf]
    %v369 = vld [vmem:[#allocation2 + $0x78c] sm:$0xff]
    %v370 = vld [vmem:[#allocation2 + $0x794] sm:$0xff]
    %v371 = vld [vmem:[#allocation2 + $0x79c] sm:$0xff]
    %v372 = vld [vmem:[#allocation2 + $0x7a4] sm:$0xf]
    %v373 = vld [vmem:[#allocation2 + $0x7a8] sm:$0xff]
    %v374 = vld [vmem:[#allocation2 + $0x7b0] sm:$0xff]
    %v375 = vld [vmem:[#allocation2 + $0x7b8] sm:$0xff]
    %v376 = vld [vmem:[#allocation2 + $0x7c0] sm:$0xf]
    %v377 = vld [vmem:[#allocation2 + $0x7c4] sm:$0xff]
    %v378 = vld [vmem:[#allocation2 + $0x7cc] sm:$0xff]
    %v379 = vld [vmem:[#allocation2 + $0x7d4] sm:$0xff]
    %v380 = vld [vmem:[#allocation2 + $0x7dc] sm:$0xf]
    %v381 = vld [vmem:[#allocation2 + $0x7e0] sm:$0xff]
    %v382 = vld [vmem:[#allocation2 + $0x7e8] sm:$0xff]
    %v383 = vld [vmem:[#allocation2 + $0x7f0] sm:$0xff]
    %v384 = vld [vmem:[#allocation2 + $0x7f8] sm:$0xf]
    %v385 = vld [vmem:[#allocation2 + $0x7fc] sm:$0xff]
    %v386 = vld [vmem:[#allocation2 + $0x804] sm:$0xff]
    %v387 = vld [vmem:[#allocation2 + $0x80c] sm:$0xff]
    %v388 = vld [vmem:[#allocation2 + $0x814] sm:$0xf]
    %v389 = vld [vmem:[#allocation2 + $0x818] sm:$0xff]
    %v390 = vld [vmem:[#allocation2 + $0x820] sm:$0xff]
    %v391 = vld [vmem:[#allocation2 + $0x828] sm:$0xff]
    %v392 = vld [vmem:[#allocation2 + $0x830] sm:$0xf]
    %v393 = vld [vmem:[#allocation2 + $0x834] sm:$0xff]
    %v394 = vld [vmem:[#allocation2 + $0x83c] sm:$0xff]
    %v395 = vld [vmem:[#allocation2 + $0x844] sm:$0xff]
    %v396 = vld [vmem:[#allocation2 + $0x84c] sm:$0xf]
    %v397 = vld [vmem:[#allocation2 + $0x850] sm:$0xff]
    %v398 = vld [vmem:[#allocation2 + $0x858] sm:$0xff]
    %v399 = vld [vmem:[#allocation2 + $0x860] sm:$0xff]
    %v400 = vld [vmem:[#allocation2 + $0x868] sm:$0xf]
    %v401 = vld [vmem:[#allocation2 + $0x86c] sm:$0xff]
    %v402 = vld [vmem:[#allocation2 + $0x874] sm:$0xff]
    %v403 = vld [vmem:[#allocation2 + $0x87c] sm:$0xff]
    %v404 = vld [vmem:[#allocation2 + $0x884] sm:$0xf]
    %v405 = vld [vmem:[#allocation2 + $0x888] sm:$0xff]
    %v406 = vld [vmem:[#allocation2 + $0x890] sm:$0xff]
    %v407 = vld [vmem:[#allocation2 + $0x898] sm:$0xff]
    %v408 = vld [vmem:[#allocation2 + $0x8a0] sm:$0xf]
    %v409 = vld [vmem:[#allocation2 + $0x8a4] sm:$0xff]
    %v410 = vld [vmem:[#allocation2 + $0x8ac] sm:$0xff]
    %v411 = vld [vmem:[#allocation2 + $0x8b4] sm:$0xff]
    %v412 = vld [vmem:[#allocation2 + $0x8bc] sm:$0xf]
    %v413 = vld [vmem:[#allocation2 + $0x8c0] sm:$0xff]
    %v414 = vld [vmem:[#allocation2 + $0x8c8] sm:$0xff]
    %v415 = vld [vmem:[#allocation2 + $0x8d0] sm:$0xff]
    %v416 = vld [vmem:[#allocation2 + $0x8d8] sm:$0xf]
    %v417 = vld [vmem:[#allocation2 + $0x8dc] sm:$0xff]
    %v418 = vld [vmem:[#allocation2 + $0x8e4] sm:$0xff]
    %v419 = vld [vmem:[#allocation2 + $0x8ec] sm:$0xff]
    %v420 = vld [vmem:[#allocation2 + $0x8f4] sm:$0xf]
    %v421 = vld [vmem:[#allocation2 + $0x8f8] sm:$0xff]
    %v422 = vld [vmem:[#allocation2 + $0x900] sm:$0xff]
    %v423 = vld [vmem:[#allocation2 + $0x908] sm:$0xff]
    %v424 = vld [vmem:[#allocation2 + $0x910] sm:$0xf]
    %v425 = vld [vmem:[#allocation2 + $0x914] sm:$0xff]
    %v426 = vld [vmem:[#allocation2 + $0x91c] sm:$0xff]
    %v427 = vld [vmem:[#allocation2 + $0x924] sm:$0xff]
    %v428 = vld [vmem:[#allocation2 + $0x92c] sm:$0xf]
    %v429 = vld [vmem:[#allocation2 + $0x930] sm:$0xff]
    %v430 = vld [vmem:[#allocation2 + $0x938] sm:$0xff]
    %v431 = vld [vmem:[#allocation2 + $0x940] sm:$0xff]
    %v432 = vld [vmem:[#allocation2 + $0x948] sm:$0xf]
    %v433 = vld [vmem:[#allocation2 + $0x94c] sm:$0xff]
    %v434 = vld [vmem:[#allocation2 + $0x954] sm:$0xff]
    %v435 = vld [vmem:[#allocation2 + $0x95c] sm:$0xff]
    %v436 = vld [vmem:[#allocation2 + $0x964] sm:$0xf]
    %v437 = vld [vmem:[#allocation2 + $0x968] sm:$0xff]
    %v438 = vld [vmem:[#allocation2 + $0x970] sm:$0xff]
    %v439 = vld [vmem:[#allocation2 + $0x978] sm:$0xff]
    %v440 = vld [vmem:[#allocation2 + $0x980] sm:$0xf]
    %v441 = vld [vmem:[#allocation2 + $0x984] sm:$0xff]
    %v442 = vld [vmem:[#allocation2 + $0x98c] sm:$0xff]
    %v443 = vld [vmem:[#allocation2 + $0x994] sm:$0xff]
    %v444 = vld [vmem:[#allocation2 + $0x99c] sm:$0xf]
    %v445 = vld [vmem:[#allocation2 + $0x9a0] sm:$0xff]
    %v446 = vld [vmem:[#allocation2 + $0x9a8] sm:$0xff]
    %v447 = vld [vmem:[#allocation2 + $0x9b0] sm:$0xff]
    %v448 = vld [vmem:[#allocation2 + $0x9b8] sm:$0xf]
    %v449 = vld [vmem:[#allocation2 + $0x9bc] sm:$0xff]
    %v450 = vld [vmem:[#allocation2 + $0x9c4] sm:$0xff]
    %v451 = vld [vmem:[#allocation2 + $0x9cc] sm:$0xff]
    %v452 = vld [vmem:[#allocation2 + $0x9d4] sm:$0xf]
    %v453 = vld [vmem:[#allocation2 + $0x9d8] sm:$0xff]
    %v454 = vld [vmem:[#allocation2 + $0x9e0] sm:$0xff]
    %v455 = vld [vmem:[#allocation2 + $0x9e8] sm:$0xff]
    %v456 = vld [vmem:[#allocation2 + $0x9f0] sm:$0xf]
    %v457 = vld [vmem:[#allocation2 + $0x9f4] sm:$0xff]
    %v458 = vld [vmem:[#allocation2 + $0x9fc] sm:$0xff]
    %v459 = vld [vmem:[#allocation2 + $0xa04] sm:$0xff]
    %v460 = vld [vmem:[#allocation2 + $0xa0c] sm:$0xf]
    %v461 = vld [vmem:[#allocation2 + $0xa10] sm:$0xff]
    %v462 = vld [vmem:[#allocation2 + $0xa18] sm:$0xff]
    %v463 = vld [vmem:[#allocation2 + $0xa20] sm:$0xff]
    %v464 = vld [vmem:[#allocation2 + $0xa28] sm:$0xf]
    %v465 = vld [vmem:[#allocation2 + $0xa2c] sm:$0xff]
    %v466 = vld [vmem:[#allocation2 + $0xa34] sm:$0xff]
    %v467 = vld [vmem:[#allocation2 + $0xa3c] sm:$0xff]
    %v468 = vld [vmem:[#allocation2 + $0xa44] sm:$0xf]
    %v469 = vld [vmem:[#allocation2 + $0xa48] sm:$0xff]
    %v470 = vld [vmem:[#allocation2 + $0xa50] sm:$0xff]
    %v471 = vld [vmem:[#allocation2 + $0xa58] sm:$0xff]
    %v472 = vld [vmem:[#allocation2 + $0xa60] sm:$0xf]
    %v473 = vld [vmem:[#allocation2 + $0xa64] sm:$0xff]
    %v474 = vld [vmem:[#allocation2 + $0xa6c] sm:$0xff]
    %v475 = vld [vmem:[#allocation2 + $0xa74] sm:$0xff]
    %v476 = vld [vmem:[#allocation2 + $0xa7c] sm:$0xf]
    %v477 = vld [vmem:[#allocation2 + $0xa80] sm:$0xff]
    %v478 = vld [vmem:[#allocation2 + $0xa88] sm:$0xff]
    %v479 = vld [vmem:[#allocation2 + $0xa90] sm:$0xff]
    %v480 = vld [vmem:[#allocation2 + $0xa98] sm:$0xf]
    %v481 = vld [vmem:[#allocation2 + $0xa9c] sm:$0xff]
    %v482 = vld [vmem:[#allocation2 + $0xaa4] sm:$0xff]
    %v483 = vld [vmem:[#allocation2 + $0xaac] sm:$0xff]
    %v484 = vld [vmem:[#allocation2 + $0xab4] sm:$0xf]
    %v485 = vld [vmem:[#allocation4] sm:$0x7f]
    %v487 = vlaneseq
    %v488 = vshrl.u32 %v487, 7
    %v489 = vsub.s32 0, %v488
    %v490 = vrot.slane %v485, %v489
    %v491 = vlaneseq
    %v492 = vshrl.u32 %v491, 7
    %v493 = vsub.s32 1, %v492
    %v494 = vrot.slane %v485, %v493
    %v495 = vlaneseq
    %v496 = vshrl.u32 %v495, 7
    %v497 = vsub.s32 2, %v496
    %v498 = vrot.slane %v485, %v497
    %v499 = vlaneseq
    %v500 = vshrl.u32 %v499, 7
    %v501 = vsub.s32 3, %v500
    %v502 = vrot.slane %v485, %v501
    %v503 = vlaneseq
    %v504 = vshrl.u32 %v503, 7
    %v505 = vsub.s32 4, %v504
    %v506 = vrot.slane %v485, %v505
    %v507 = vlaneseq
    %v508 = vshrl.u32 %v507, 7
    %v509 = vsub.s32 5, %v508
    %v510 = vrot.slane %v485, %v509
    %v511 = vlaneseq
    %v512 = vshrl.u32 %v511, 7
    %v513 = vsub.s32 6, %v512
    %v514 = vrot.slane %v485, %v513
    %v914 = vunpack.c.l.b16 %v93
    %v915 = vunpack.c.h.b16 %v93
    %v916 = vunpack.c.l.b16 %v94
    %v917 = vunpack.c.h.b16 %v94
    %v918 = vunpack.c.l.b16 %v95
    %v919 = vunpack.c.h.b16 %v95
    %v920 = vunpack.c.l.b16 %v96
    %v921 = vunpack.c.l.b16 %v97
    %v922 = vunpack.c.h.b16 %v97
    %v923 = vunpack.c.l.b16 %v98
    %v924 = vunpack.c.h.b16 %v98
    %v925 = vunpack.c.l.b16 %v99
    %v926 = vunpack.c.h.b16 %v99
    %v927 = vunpack.c.l.b16 %v100
    %v928 = vunpack.c.l.b16 %v101
    %v929 = vunpack.c.h.b16 %v101
    %v930 = vunpack.c.l.b16 %v102
    %v931 = vunpack.c.h.b16 %v102
    %v932 = vunpack.c.l.b16 %v103
    %v933 = vunpack.c.h.b16 %v103
    %v934 = vunpack.c.l.b16 %v104
    %v935 = vunpack.c.l.b16 %v105
    %v936 = vunpack.c.h.b16 %v105
    %v937 = vunpack.c.l.b16 %v106
    %v938 = vunpack.c.h.b16 %v106
    %v939 = vunpack.c.l.b16 %v107
    %v940 = vunpack.c.h.b16 %v107
    %v941 = vunpack.c.l.b16 %v108
    %v942 = vunpack.c.l.b16 %v109
    %v943 = vunpack.c.h.b16 %v109
    %v944 = vunpack.c.l.b16 %v110
    %v945 = vunpack.c.h.b16 %v110
    %v946 = vunpack.c.l.b16 %v111
    %v947 = vunpack.c.h.b16 %v111
    %v948 = vunpack.c.l.b16 %v112
    %v949 = vunpack.c.l.b16 %v113
    %v950 = vunpack.c.h.b16 %v113
    %v951 = vunpack.c.l.b16 %v114
    %v952 = vunpack.c.h.b16 %v114
    %v953 = vunpack.c.l.b16 %v115
    %v954 = vunpack.c.h.b16 %v115
    %v955 = vunpack.c.l.b16 %v116
    %v956 = vunpack.c.l.b16 %v117
    %v957 = vunpack.c.h.b16 %v117
    %v958 = vunpack.c.l.b16 %v118
    %v959 = vunpack.c.h.b16 %v118
    %v960 = vunpack.c.l.b16 %v119
    %v961 = vunpack.c.h.b16 %v119
    %v962 = vunpack.c.l.b16 %v120
    %v963 = vunpack.c.l.b16 %v121
    %v964 = vunpack.c.h.b16 %v121
    %v965 = vunpack.c.l.b16 %v122
    %v966 = vunpack.c.h.b16 %v122
    %v967 = vunpack.c.l.b16 %v123
    %v968 = vunpack.c.h.b16 %v123
    %v969 = vunpack.c.l.b16 %v124
    %v970 = vunpack.c.l.b16 %v125
    %v971 = vunpack.c.h.b16 %v125
    %v972 = vunpack.c.l.b16 %v126
    %v973 = vunpack.c.h.b16 %v126
    %v974 = vunpack.c.l.b16 %v127
    %v975 = vunpack.c.h.b16 %v127
    %v976 = vunpack.c.l.b16 %v128
    %v977 = vunpack.c.l.b16 %v129
    %v978 = vunpack.c.h.b16 %v129
    %v979 = vunpack.c.l.b16 %v130
    %v980 = vunpack.c.h.b16 %v130
    %v981 = vunpack.c.l.b16 %v131
    %v982 = vunpack.c.h.b16 %v131
    %v983 = vunpack.c.l.b16 %v132
    %v984 = vunpack.c.l.b16 %v133
    %v985 = vunpack.c.h.b16 %v133
    %v986 = vunpack.c.l.b16 %v134
    %v987 = vunpack.c.h.b16 %v134
    %v988 = vunpack.c.l.b16 %v135
    %v989 = vunpack.c.h.b16 %v135
    %v990 = vunpack.c.l.b16 %v136
    %v991 = vunpack.c.l.b16 %v137
    %v992 = vunpack.c.h.b16 %v137
    %v993 = vunpack.c.l.b16 %v138
    %v994 = vunpack.c.h.b16 %v138
    %v995 = vunpack.c.l.b16 %v139
    %v996 = vunpack.c.h.b16 %v139
    %v997 = vunpack.c.l.b16 %v140
    %v998 = vunpack.c.l.b16 %v141
    %v999 = vunpack.c.h.b16 %v141
    %v1000 = vunpack.c.l.b16 %v142
    %v1001 = vunpack.c.h.b16 %v142
    %v1002 = vunpack.c.l.b16 %v143
    %v1003 = vunpack.c.h.b16 %v143
    %v1004 = vunpack.c.l.b16 %v144
    %v1005 = vunpack.c.l.b16 %v145
    %v1006 = vunpack.c.h.b16 %v145
    %v1007 = vunpack.c.l.b16 %v146
    %v1008 = vunpack.c.h.b16 %v146
    %v1009 = vunpack.c.l.b16 %v147
    %v1010 = vunpack.c.h.b16 %v147
    %v1011 = vunpack.c.l.b16 %v148
    %v1012 = vunpack.c.l.b16 %v149
    %v1013 = vunpack.c.h.b16 %v149
    %v1014 = vunpack.c.l.b16 %v150
    %v1015 = vunpack.c.h.b16 %v150
    %v1016 = vunpack.c.l.b16 %v151
    %v1017 = vunpack.c.h.b16 %v151
    %v1018 = vunpack.c.l.b16 %v152
    %v1019 = vunpack.c.l.b16 %v153
    %v1020 = vunpack.c.h.b16 %v153
    %v1021 = vunpack.c.l.b16 %v154
    %v1022 = vunpack.c.h.b16 %v154
    %v1023 = vunpack.c.l.b16 %v155
    %v1024 = vunpack.c.h.b16 %v155
    %v1025 = vunpack.c.l.b16 %v156
    %v1026 = vunpack.c.l.b16 %v157
    %v1027 = vunpack.c.h.b16 %v157
    %v1028 = vunpack.c.l.b16 %v158
    %v1029 = vunpack.c.h.b16 %v158
    %v1030 = vunpack.c.l.b16 %v159
    %v1031 = vunpack.c.h.b16 %v159
    %v1032 = vunpack.c.l.b16 %v160
    %v1033 = vunpack.c.l.b16 %v161
    %v1034 = vunpack.c.h.b16 %v161
    %v1035 = vunpack.c.l.b16 %v162
    %v1036 = vunpack.c.h.b16 %v162
    %v1037 = vunpack.c.l.b16 %v163
    %v1038 = vunpack.c.h.b16 %v163
    %v1039 = vunpack.c.l.b16 %v164
    %v1040 = vunpack.c.l.b16 %v165
    %v1041 = vunpack.c.h.b16 %v165
    %v1042 = vunpack.c.l.b16 %v166
    %v1043 = vunpack.c.h.b16 %v166
    %v1044 = vunpack.c.l.b16 %v167
    %v1045 = vunpack.c.h.b16 %v167
    %v1046 = vunpack.c.l.b16 %v168
    %v1047 = vunpack.c.l.b16 %v169
    %v1048 = vunpack.c.h.b16 %v169
    %v1049 = vunpack.c.l.b16 %v170
    %v1050 = vunpack.c.h.b16 %v170
    %v1051 = vunpack.c.l.b16 %v171
    %v1052 = vunpack.c.h.b16 %v171
    %v1053 = vunpack.c.l.b16 %v172
    %v1054 = vunpack.c.l.b16 %v173
    %v1055 = vunpack.c.h.b16 %v173
    %v1056 = vunpack.c.l.b16 %v174
    %v1057 = vunpack.c.h.b16 %v174
    %v1058 = vunpack.c.l.b16 %v175
    %v1059 = vunpack.c.h.b16 %v175
    %v1060 = vunpack.c.l.b16 %v176
    %v1061 = vunpack.c.l.b16 %v177
    %v1062 = vunpack.c.h.b16 %v177
    %v1063 = vunpack.c.l.b16 %v178
    %v1064 = vunpack.c.h.b16 %v178
    %v1065 = vunpack.c.l.b16 %v179
    %v1066 = vunpack.c.h.b16 %v179
    %v1067 = vunpack.c.l.b16 %v180
    %v1068 = vunpack.c.l.b16 %v181
    %v1069 = vunpack.c.h.b16 %v181
    %v1070 = vunpack.c.l.b16 %v182
    %v1071 = vunpack.c.h.b16 %v182
    %v1072 = vunpack.c.l.b16 %v183
    %v1073 = vunpack.c.h.b16 %v183
    %v1074 = vunpack.c.l.b16 %v184
    %v1075 = vunpack.c.l.b16 %v185
    %v1076 = vunpack.c.h.b16 %v185
    %v1077 = vunpack.c.l.b16 %v186
    %v1078 = vunpack.c.h.b16 %v186
    %v1079 = vunpack.c.l.b16 %v187
    %v1080 = vunpack.c.h.b16 %v187
    %v1081 = vunpack.c.l.b16 %v188
    %v1082 = vunpack.c.l.b16 %v189
    %v1083 = vunpack.c.h.b16 %v189
    %v1084 = vunpack.c.l.b16 %v190
    %v1085 = vunpack.c.h.b16 %v190
    %v1086 = vunpack.c.l.b16 %v191
    %v1087 = vunpack.c.h.b16 %v191
    %v1088 = vunpack.c.l.b16 %v192
    %v1089 = vunpack.c.l.b16 %v193
    %v1090 = vunpack.c.h.b16 %v193
    %v1091 = vunpack.c.l.b16 %v194
    %v1092 = vunpack.c.h.b16 %v194
    %v1093 = vunpack.c.l.b16 %v195
    %v1094 = vunpack.c.h.b16 %v195
    %v1095 = vunpack.c.l.b16 %v196
    %v1096 = vunpack.c.l.b16 %v197
    %v1097 = vunpack.c.h.b16 %v197
    %v1098 = vunpack.c.l.b16 %v198
    %v1099 = vunpack.c.h.b16 %v198
    %v1100 = vunpack.c.l.b16 %v199
    %v1101 = vunpack.c.h.b16 %v199
    %v1102 = vunpack.c.l.b16 %v200
    %v1103 = vunpack.c.l.b16 %v201
    %v1104 = vunpack.c.h.b16 %v201
    %v1105 = vunpack.c.l.b16 %v202
    %v1106 = vunpack.c.h.b16 %v202
    %v1107 = vunpack.c.l.b16 %v203
    %v1108 = vunpack.c.h.b16 %v203
    %v1109 = vunpack.c.l.b16 %v204
    %v1110 = vunpack.c.l.b16 %v205
    %v1111 = vunpack.c.h.b16 %v205
    %v1112 = vunpack.c.l.b16 %v206
    %v1113 = vunpack.c.h.b16 %v206
    %v1114 = vunpack.c.l.b16 %v207
    %v1115 = vunpack.c.h.b16 %v207
    %v1116 = vunpack.c.l.b16 %v208
    %v1117 = vunpack.c.l.b16 %v209
    %v1118 = vunpack.c.h.b16 %v209
    %v1119 = vunpack.c.l.b16 %v210
    %v1120 = vunpack.c.h.b16 %v210
    %v1121 = vunpack.c.l.b16 %v211
    %v1122 = vunpack.c.h.b16 %v211
    %v1123 = vunpack.c.l.b16 %v212
    %v1124 = vunpack.c.l.b16 %v213
    %v1125 = vunpack.c.h.b16 %v213
    %v1126 = vunpack.c.l.b16 %v214
    %v1127 = vunpack.c.h.b16 %v214
    %v1128 = vunpack.c.l.b16 %v215
    %v1129 = vunpack.c.h.b16 %v215
    %v1130 = vunpack.c.l.b16 %v216
    %v1131 = vunpack.c.l.b16 %v217
    %v1132 = vunpack.c.h.b16 %v217
    %v1133 = vunpack.c.l.b16 %v218
    %v1134 = vunpack.c.h.b16 %v218
    %v1135 = vunpack.c.l.b16 %v219
    %v1136 = vunpack.c.h.b16 %v219
    %v1137 = vunpack.c.l.b16 %v220
    %v1138 = vunpack.c.l.b16 %v221
    %v1139 = vunpack.c.h.b16 %v221
    %v1140 = vunpack.c.l.b16 %v222
    %v1141 = vunpack.c.h.b16 %v222
    %v1142 = vunpack.c.l.b16 %v223
    %v1143 = vunpack.c.h.b16 %v223
    %v1144 = vunpack.c.l.b16 %v224
    %v1145 = vunpack.c.l.b16 %v225
    %v1146 = vunpack.c.h.b16 %v225
    %v1147 = vunpack.c.l.b16 %v226
    %v1148 = vunpack.c.h.b16 %v226
    %v1149 = vunpack.c.l.b16 %v227
    %v1150 = vunpack.c.h.b16 %v227
    %v1151 = vunpack.c.l.b16 %v228
    %v1152 = vunpack.c.l.b16 %v229
    %v1153 = vunpack.c.h.b16 %v229
    %v1154 = vunpack.c.l.b16 %v230
    %v1155 = vunpack.c.h.b16 %v230
    %v1156 = vunpack.c.l.b16 %v231
    %v1157 = vunpack.c.h.b16 %v231
    %v1158 = vunpack.c.l.b16 %v232
    %v1159 = vunpack.c.l.b16 %v233
    %v1160 = vunpack.c.h.b16 %v233
    %v1161 = vunpack.c.l.b16 %v234
    %v1162 = vunpack.c.h.b16 %v234
    %v1163 = vunpack.c.l.b16 %v235
    %v1164 = vunpack.c.h.b16 %v235
    %v1165 = vunpack.c.l.b16 %v236
    %v1166 = vunpack.c.l.b16 %v237
    %v1167 = vunpack.c.h.b16 %v237
    %v1168 = vunpack.c.l.b16 %v238
    %v1169 = vunpack.c.h.b16 %v238
    %v1170 = vunpack.c.l.b16 %v239
    %v1171 = vunpack.c.h.b16 %v239
    %v1172 = vunpack.c.l.b16 %v240
    %v1173 = vunpack.c.l.b16 %v241
    %v1174 = vunpack.c.h.b16 %v241
    %v1175 = vunpack.c.l.b16 %v242
    %v1176 = vunpack.c.h.b16 %v242
    %v1177 = vunpack.c.l.b16 %v243
    %v1178 = vunpack.c.h.b16 %v243
    %v1179 = vunpack.c.l.b16 %v244
    %v1180 = vunpack.c.l.b16 %v245
    %v1181 = vunpack.c.h.b16 %v245
    %v1182 = vunpack.c.l.b16 %v246
    %v1183 = vunpack.c.h.b16 %v246
    %v1184 = vunpack.c.l.b16 %v247
    %v1185 = vunpack.c.h.b16 %v247
    %v1186 = vunpack.c.l.b16 %v248
    %v1187 = vunpack.c.l.b16 %v249
    %v1188 = vunpack.c.h.b16 %v249
    %v1189 = vunpack.c.l.b16 %v250
    %v1190 = vunpack.c.h.b16 %v250
    %v1191 = vunpack.c.l.b16 %v251
    %v1192 = vunpack.c.h.b16 %v251
    %v1193 = vunpack.c.l.b16 %v252
    %v1194 = vunpack.c.l.b16 %v253
    %v1195 = vunpack.c.h.b16 %v253
    %v1196 = vunpack.c.l.b16 %v254
    %v1197 = vunpack.c.h.b16 %v254
    %v1198 = vunpack.c.l.b16 %v255
    %v1199 = vunpack.c.h.b16 %v255
    %v1200 = vunpack.c.l.b16 %v256
    %v1201 = vunpack.c.l.b16 %v257
    %v1202 = vunpack.c.h.b16 %v257
    %v1203 = vunpack.c.l.b16 %v258
    %v1204 = vunpack.c.h.b16 %v258
    %v1205 = vunpack.c.l.b16 %v259
    %v1206 = vunpack.c.h.b16 %v259
    %v1207 = vunpack.c.l.b16 %v260
    %v1208 = vunpack.c.l.b16 %v261
    %v1209 = vunpack.c.h.b16 %v261
    %v1210 = vunpack.c.l.b16 %v262
    %v1211 = vunpack.c.h.b16 %v262
    %v1212 = vunpack.c.l.b16 %v263
    %v1213 = vunpack.c.h.b16 %v263
    %v1214 = vunpack.c.l.b16 %v264
    %v1215 = vunpack.c.l.b16 %v265
    %v1216 = vunpack.c.h.b16 %v265
    %v1217 = vunpack.c.l.b16 %v266
    %v1218 = vunpack.c.h.b16 %v266
    %v1219 = vunpack.c.l.b16 %v267
    %v1220 = vunpack.c.h.b16 %v267
    %v1221 = vunpack.c.l.b16 %v268
    %v1222 = vunpack.c.l.b16 %v269
    %v1223 = vunpack.c.h.b16 %v269
    %v1224 = vunpack.c.l.b16 %v270
    %v1225 = vunpack.c.h.b16 %v270
    %v1226 = vunpack.c.l.b16 %v271
    %v1227 = vunpack.c.h.b16 %v271
    %v1228 = vunpack.c.l.b16 %v272
    %v1229 = vunpack.c.l.b16 %v273
    %v1230 = vunpack.c.h.b16 %v273
    %v1231 = vunpack.c.l.b16 %v274
    %v1232 = vunpack.c.h.b16 %v274
    %v1233 = vunpack.c.l.b16 %v275
    %v1234 = vunpack.c.h.b16 %v275
    %v1235 = vunpack.c.l.b16 %v276
    %v1236 = vunpack.c.l.b16 %v277
    %v1237 = vunpack.c.h.b16 %v277
    %v1238 = vunpack.c.l.b16 %v278
    %v1239 = vunpack.c.h.b16 %v278
    %v1240 = vunpack.c.l.b16 %v279
    %v1241 = vunpack.c.h.b16 %v279
    %v1242 = vunpack.c.l.b16 %v280
    %v1243 = vunpack.c.l.b16 %v281
    %v1244 = vunpack.c.h.b16 %v281
    %v1245 = vunpack.c.l.b16 %v282
    %v1246 = vunpack.c.h.b16 %v282
    %v1247 = vunpack.c.l.b16 %v283
    %v1248 = vunpack.c.h.b16 %v283
    %v1249 = vunpack.c.l.b16 %v284
    %v1250 = vunpack.c.l.b16 %v285
    %v1251 = vunpack.c.h.b16 %v285
    %v1252 = vunpack.c.l.b16 %v286
    %v1253 = vunpack.c.h.b16 %v286
    %v1254 = vunpack.c.l.b16 %v287
    %v1255 = vunpack.c.h.b16 %v287
    %v1256 = vunpack.c.l.b16 %v288
    %v1257 = vunpack.c.l.b16 %v289
    %v1258 = vunpack.c.h.b16 %v289
    %v1259 = vunpack.c.l.b16 %v290
    %v1260 = vunpack.c.h.b16 %v290
    %v1261 = vunpack.c.l.b16 %v291
    %v1262 = vunpack.c.h.b16 %v291
    %v1263 = vunpack.c.l.b16 %v292
    %v1264 = vunpack.c.l.b16 %v293
    %v1265 = vunpack.c.h.b16 %v293
    %v1266 = vunpack.c.l.b16 %v294
    %v1267 = vunpack.c.h.b16 %v294
    %v1268 = vunpack.c.l.b16 %v295
    %v1269 = vunpack.c.h.b16 %v295
    %v1270 = vunpack.c.l.b16 %v296
    %v1271 = vunpack.c.l.b16 %v297
    %v1272 = vunpack.c.h.b16 %v297
    %v1273 = vunpack.c.l.b16 %v298
    %v1274 = vunpack.c.h.b16 %v298
    %v1275 = vunpack.c.l.b16 %v299
    %v1276 = vunpack.c.h.b16 %v299
    %v1277 = vunpack.c.l.b16 %v300
    %v1278 = vunpack.c.l.b16 %v301
    %v1279 = vunpack.c.h.b16 %v301
    %v1280 = vunpack.c.l.b16 %v302
    %v1281 = vunpack.c.h.b16 %v302
    %v1282 = vunpack.c.l.b16 %v303
    %v1283 = vunpack.c.h.b16 %v303
    %v1284 = vunpack.c.l.b16 %v304
    %v1285 = vunpack.c.l.b16 %v305
    %v1286 = vunpack.c.h.b16 %v305
    %v1287 = vunpack.c.l.b16 %v306
    %v1288 = vunpack.c.h.b16 %v306
    %v1289 = vunpack.c.l.b16 %v307
    %v1290 = vunpack.c.h.b16 %v307
    %v1291 = vunpack.c.l.b16 %v308
    %v1292 = vunpack.c.l.b16 %v309
    %v1293 = vunpack.c.h.b16 %v309
    %v1294 = vunpack.c.l.b16 %v310
    %v1295 = vunpack.c.h.b16 %v310
    %v1296 = vunpack.c.l.b16 %v311
    %v1297 = vunpack.c.h.b16 %v311
    %v1298 = vunpack.c.l.b16 %v312
    %v1299 = vunpack.c.l.b16 %v313
    %v1300 = vunpack.c.h.b16 %v313
    %v1301 = vunpack.c.l.b16 %v314
    %v1302 = vunpack.c.h.b16 %v314
    %v1303 = vunpack.c.l.b16 %v315
    %v1304 = vunpack.c.h.b16 %v315
    %v1305 = vunpack.c.l.b16 %v316
    %v1306 = vunpack.c.l.b16 %v317
    %v1307 = vunpack.c.h.b16 %v317
    %v1308 = vunpack.c.l.b16 %v318
    %v1309 = vunpack.c.h.b16 %v318
    %v1310 = vunpack.c.l.b16 %v319
    %v1311 = vunpack.c.h.b16 %v319
    %v1312 = vunpack.c.l.b16 %v320
    %v1313 = vunpack.c.l.b16 %v321
    %v1314 = vunpack.c.h.b16 %v321
    %v1315 = vunpack.c.l.b16 %v322
    %v1316 = vunpack.c.h.b16 %v322
    %v1317 = vunpack.c.l.b16 %v323
    %v1318 = vunpack.c.h.b16 %v323
    %v1319 = vunpack.c.l.b16 %v324
    %v1320 = vunpack.c.l.b16 %v325
    %v1321 = vunpack.c.h.b16 %v325
    %v1322 = vunpack.c.l.b16 %v326
    %v1323 = vunpack.c.h.b16 %v326
    %v1324 = vunpack.c.l.b16 %v327
    %v1325 = vunpack.c.h.b16 %v327
    %v1326 = vunpack.c.l.b16 %v328
    %v1327 = vunpack.c.l.b16 %v329
    %v1328 = vunpack.c.h.b16 %v329
    %v1329 = vunpack.c.l.b16 %v330
    %v1330 = vunpack.c.h.b16 %v330
    %v1331 = vunpack.c.l.b16 %v331
    %v1332 = vunpack.c.h.b16 %v331
    %v1333 = vunpack.c.l.b16 %v332
    %v1334 = vunpack.c.l.b16 %v333
    %v1335 = vunpack.c.h.b16 %v333
    %v1336 = vunpack.c.l.b16 %v334
    %v1337 = vunpack.c.h.b16 %v334
    %v1338 = vunpack.c.l.b16 %v335
    %v1339 = vunpack.c.h.b16 %v335
    %v1340 = vunpack.c.l.b16 %v336
    %v1341 = vunpack.c.l.b16 %v337
    %v1342 = vunpack.c.h.b16 %v337
    %v1343 = vunpack.c.l.b16 %v338
    %v1344 = vunpack.c.h.b16 %v338
    %v1345 = vunpack.c.l.b16 %v339
    %v1346 = vunpack.c.h.b16 %v339
    %v1347 = vunpack.c.l.b16 %v340
    %v1348 = vunpack.c.l.b16 %v341
    %v1349 = vunpack.c.h.b16 %v341
    %v1350 = vunpack.c.l.b16 %v342
    %v1351 = vunpack.c.h.b16 %v342
    %v1352 = vunpack.c.l.b16 %v343
    %v1353 = vunpack.c.h.b16 %v343
    %v1354 = vunpack.c.l.b16 %v344
    %v1355 = vunpack.c.l.b16 %v345
    %v1356 = vunpack.c.h.b16 %v345
    %v1357 = vunpack.c.l.b16 %v346
    %v1358 = vunpack.c.h.b16 %v346
    %v1359 = vunpack.c.l.b16 %v347
    %v1360 = vunpack.c.h.b16 %v347
    %v1361 = vunpack.c.l.b16 %v348
    %v1362 = vunpack.c.l.b16 %v349
    %v1363 = vunpack.c.h.b16 %v349
    %v1364 = vunpack.c.l.b16 %v350
    %v1365 = vunpack.c.h.b16 %v350
    %v1366 = vunpack.c.l.b16 %v351
    %v1367 = vunpack.c.h.b16 %v351
    %v1368 = vunpack.c.l.b16 %v352
    %v1369 = vunpack.c.l.b16 %v353
    %v1370 = vunpack.c.h.b16 %v353
    %v1371 = vunpack.c.l.b16 %v354
    %v1372 = vunpack.c.h.b16 %v354
    %v1373 = vunpack.c.l.b16 %v355
    %v1374 = vunpack.c.h.b16 %v355
    %v1375 = vunpack.c.l.b16 %v356
    %v1376 = vunpack.c.l.b16 %v357
    %v1377 = vunpack.c.h.b16 %v357
    %v1378 = vunpack.c.l.b16 %v358
    %v1379 = vunpack.c.h.b16 %v358
    %v1380 = vunpack.c.l.b16 %v359
    %v1381 = vunpack.c.h.b16 %v359
    %v1382 = vunpack.c.l.b16 %v360
    %v1383 = vunpack.c.l.b16 %v361
    %v1384 = vunpack.c.h.b16 %v361
    %v1385 = vunpack.c.l.b16 %v362
    %v1386 = vunpack.c.h.b16 %v362
    %v1387 = vunpack.c.l.b16 %v363
    %v1388 = vunpack.c.h.b16 %v363
    %v1389 = vunpack.c.l.b16 %v364
    %v1390 = vunpack.c.l.b16 %v365
    %v1391 = vunpack.c.h.b16 %v365
    %v1392 = vunpack.c.l.b16 %v366
    %v1393 = vunpack.c.h.b16 %v366
    %v1394 = vunpack.c.l.b16 %v367
    %v1395 = vunpack.c.h.b16 %v367
    %v1396 = vunpack.c.l.b16 %v368
    %v1397 = vunpack.c.l.b16 %v369
    %v1398 = vunpack.c.h.b16 %v369
    %v1399 = vunpack.c.l.b16 %v370
    %v1400 = vunpack.c.h.b16 %v370
    %v1401 = vunpack.c.l.b16 %v371
    %v1402 = vunpack.c.h.b16 %v371
    %v1403 = vunpack.c.l.b16 %v372
    %v1404 = vunpack.c.l.b16 %v373
    %v1405 = vunpack.c.h.b16 %v373
    %v1406 = vunpack.c.l.b16 %v374
    %v1407 = vunpack.c.h.b16 %v374
    %v1408 = vunpack.c.l.b16 %v375
    %v1409 = vunpack.c.h.b16 %v375
    %v1410 = vunpack.c.l.b16 %v376
    %v1411 = vunpack.c.l.b16 %v377
    %v1412 = vunpack.c.h.b16 %v377
    %v1413 = vunpack.c.l.b16 %v378
    %v1414 = vunpack.c.h.b16 %v378
    %v1415 = vunpack.c.l.b16 %v379
    %v1416 = vunpack.c.h.b16 %v379
    %v1417 = vunpack.c.l.b16 %v380
    %v1418 = vunpack.c.l.b16 %v381
    %v1419 = vunpack.c.h.b16 %v381
    %v1420 = vunpack.c.l.b16 %v382
    %v1421 = vunpack.c.h.b16 %v382
    %v1422 = vunpack.c.l.b16 %v383
    %v1423 = vunpack.c.h.b16 %v383
    %v1424 = vunpack.c.l.b16 %v384
    %v1425 = vunpack.c.l.b16 %v385
    %v1426 = vunpack.c.h.b16 %v385
    %v1427 = vunpack.c.l.b16 %v386
    %v1428 = vunpack.c.h.b16 %v386
    %v1429 = vunpack.c.l.b16 %v387
    %v1430 = vunpack.c.h.b16 %v387
    %v1431 = vunpack.c.l.b16 %v388
    %v1432 = vunpack.c.l.b16 %v389
    %v1433 = vunpack.c.h.b16 %v389
    %v1434 = vunpack.c.l.b16 %v390
    %v1435 = vunpack.c.h.b16 %v390
    %v1436 = vunpack.c.l.b16 %v391
    %v1437 = vunpack.c.h.b16 %v391
    %v1438 = vunpack.c.l.b16 %v392
    %v1439 = vunpack.c.l.b16 %v393
    %v1440 = vunpack.c.h.b16 %v393
    %v1441 = vunpack.c.l.b16 %v394
    %v1442 = vunpack.c.h.b16 %v394
    %v1443 = vunpack.c.l.b16 %v395
    %v1444 = vunpack.c.h.b16 %v395
    %v1445 = vunpack.c.l.b16 %v396
    %v1446 = vunpack.c.l.b16 %v397
    %v1447 = vunpack.c.h.b16 %v397
    %v1448 = vunpack.c.l.b16 %v398
    %v1449 = vunpack.c.h.b16 %v398
    %v1450 = vunpack.c.l.b16 %v399
    %v1451 = vunpack.c.h.b16 %v399
    %v1452 = vunpack.c.l.b16 %v400
    %v1453 = vunpack.c.l.b16 %v401
    %v1454 = vunpack.c.h.b16 %v401
    %v1455 = vunpack.c.l.b16 %v402
    %v1456 = vunpack.c.h.b16 %v402
    %v1457 = vunpack.c.l.b16 %v403
    %v1458 = vunpack.c.h.b16 %v403
    %v1459 = vunpack.c.l.b16 %v404
    %v1460 = vunpack.c.l.b16 %v405
    %v1461 = vunpack.c.h.b16 %v405
    %v1462 = vunpack.c.l.b16 %v406
    %v1463 = vunpack.c.h.b16 %v406
    %v1464 = vunpack.c.l.b16 %v407
    %v1465 = vunpack.c.h.b16 %v407
    %v1466 = vunpack.c.l.b16 %v408
    %v1467 = vunpack.c.l.b16 %v409
    %v1468 = vunpack.c.h.b16 %v409
    %v1469 = vunpack.c.l.b16 %v410
    %v1470 = vunpack.c.h.b16 %v410
    %v1471 = vunpack.c.l.b16 %v411
    %v1472 = vunpack.c.h.b16 %v411
    %v1473 = vunpack.c.l.b16 %v412
    %v1474 = vunpack.c.l.b16 %v413
    %v1475 = vunpack.c.h.b16 %v413
    %v1476 = vunpack.c.l.b16 %v414
    %v1477 = vunpack.c.h.b16 %v414
    %v1478 = vunpack.c.l.b16 %v415
    %v1479 = vunpack.c.h.b16 %v415
    %v1480 = vunpack.c.l.b16 %v416
    %v1481 = vunpack.c.l.b16 %v417
    %v1482 = vunpack.c.h.b16 %v417
    %v1483 = vunpack.c.l.b16 %v418
    %v1484 = vunpack.c.h.b16 %v418
    %v1485 = vunpack.c.l.b16 %v419
    %v1486 = vunpack.c.h.b16 %v419
    %v1487 = vunpack.c.l.b16 %v420
    %v1488 = vunpack.c.l.b16 %v421
    %v1489 = vunpack.c.h.b16 %v421
    %v1490 = vunpack.c.l.b16 %v422
    %v1491 = vunpack.c.h.b16 %v422
    %v1492 = vunpack.c.l.b16 %v423
    %v1493 = vunpack.c.h.b16 %v423
    %v1494 = vunpack.c.l.b16 %v424
    %v1495 = vunpack.c.l.b16 %v425
    %v1496 = vunpack.c.h.b16 %v425
    %v1497 = vunpack.c.l.b16 %v426
    %v1498 = vunpack.c.h.b16 %v426
    %v1499 = vunpack.c.l.b16 %v427
    %v1500 = vunpack.c.h.b16 %v427
    %v1501 = vunpack.c.l.b16 %v428
    %v1502 = vunpack.c.l.b16 %v429
    %v1503 = vunpack.c.h.b16 %v429
    %v1504 = vunpack.c.l.b16 %v430
    %v1505 = vunpack.c.h.b16 %v430
    %v1506 = vunpack.c.l.b16 %v431
    %v1507 = vunpack.c.h.b16 %v431
    %v1508 = vunpack.c.l.b16 %v432
    %v1509 = vunpack.c.l.b16 %v433
    %v1510 = vunpack.c.h.b16 %v433
    %v1511 = vunpack.c.l.b16 %v434
    %v1512 = vunpack.c.h.b16 %v434
    %v1513 = vunpack.c.l.b16 %v435
    %v1514 = vunpack.c.h.b16 %v435
    %v1515 = vunpack.c.l.b16 %v436
    %v1516 = vunpack.c.l.b16 %v437
    %v1517 = vunpack.c.h.b16 %v437
    %v1518 = vunpack.c.l.b16 %v438
    %v1519 = vunpack.c.h.b16 %v438
    %v1520 = vunpack.c.l.b16 %v439
    %v1521 = vunpack.c.h.b16 %v439
    %v1522 = vunpack.c.l.b16 %v440
    %v1523 = vunpack.c.l.b16 %v441
    %v1524 = vunpack.c.h.b16 %v441
    %v1525 = vunpack.c.l.b16 %v442
    %v1526 = vunpack.c.h.b16 %v442
    %v1527 = vunpack.c.l.b16 %v443
    %v1528 = vunpack.c.h.b16 %v443
    %v1529 = vunpack.c.l.b16 %v444
    %v1530 = vunpack.c.l.b16 %v445
    %v1531 = vunpack.c.h.b16 %v445
    %v1532 = vunpack.c.l.b16 %v446
    %v1533 = vunpack.c.h.b16 %v446
    %v1534 = vunpack.c.l.b16 %v447
    %v1535 = vunpack.c.h.b16 %v447
    %v1536 = vunpack.c.l.b16 %v448
    %v1537 = vunpack.c.l.b16 %v449
    %v1538 = vunpack.c.h.b16 %v449
    %v1539 = vunpack.c.l.b16 %v450
    %v1540 = vunpack.c.h.b16 %v450
    %v1541 = vunpack.c.l.b16 %v451
    %v1542 = vunpack.c.h.b16 %v451
    %v1543 = vunpack.c.l.b16 %v452
    %v1544 = vunpack.c.l.b16 %v453
    %v1545 = vunpack.c.h.b16 %v453
    %v1546 = vunpack.c.l.b16 %v454
    %v1547 = vunpack.c.h.b16 %v454
    %v1548 = vunpack.c.l.b16 %v455
    %v1549 = vunpack.c.h.b16 %v455
    %v1550 = vunpack.c.l.b16 %v456
    %v1551 = vunpack.c.l.b16 %v457
    %v1552 = vunpack.c.h.b16 %v457
    %v1553 = vunpack.c.l.b16 %v458
    %v1554 = vunpack.c.h.b16 %v458
    %v1555 = vunpack.c.l.b16 %v459
    %v1556 = vunpack.c.h.b16 %v459
    %v1557 = vunpack.c.l.b16 %v460
    %v1558 = vunpack.c.l.b16 %v461
    %v1559 = vunpack.c.h.b16 %v461
    %v1560 = vunpack.c.l.b16 %v462
    %v1561 = vunpack.c.h.b16 %v462
    %v1562 = vunpack.c.l.b16 %v463
    %v1563 = vunpack.c.h.b16 %v463
    %v1564 = vunpack.c.l.b16 %v464
    %v1565 = vunpack.c.l.b16 %v465
    %v1566 = vunpack.c.h.b16 %v465
    %v1567 = vunpack.c.l.b16 %v466
    %v1568 = vunpack.c.h.b16 %v466
    %v1569 = vunpack.c.l.b16 %v467
    %v1570 = vunpack.c.h.b16 %v467
    %v1571 = vunpack.c.l.b16 %v468
    %v1572 = vunpack.c.l.b16 %v469
    %v1573 = vunpack.c.h.b16 %v469
    %v1574 = vunpack.c.l.b16 %v470
    %v1575 = vunpack.c.h.b16 %v470
    %v1576 = vunpack.c.l.b16 %v471
    %v1577 = vunpack.c.h.b16 %v471
    %v1578 = vunpack.c.l.b16 %v472
    %v1579 = vunpack.c.l.b16 %v473
    %v1580 = vunpack.c.h.b16 %v473
    %v1581 = vunpack.c.l.b16 %v474
    %v1582 = vunpack.c.h.b16 %v474
    %v1583 = vunpack.c.l.b16 %v475
    %v1584 = vunpack.c.h.b16 %v475
    %v1585 = vunpack.c.l.b16 %v476
    %v1586 = vunpack.c.l.b16 %v477
    %v1587 = vunpack.c.h.b16 %v477
    %v1588 = vunpack.c.l.b16 %v478
    %v1589 = vunpack.c.h.b16 %v478
    %v1590 = vunpack.c.l.b16 %v479
    %v1591 = vunpack.c.h.b16 %v479
    %v1592 = vunpack.c.l.b16 %v480
    %v1593 = vunpack.c.l.b16 %v481
    %v1594 = vunpack.c.h.b16 %v481
    %v1595 = vunpack.c.l.b16 %v482
    %v1596 = vunpack.c.h.b16 %v482
    %v1597 = vunpack.c.l.b16 %v483
    %v1598 = vunpack.c.h.b16 %v483
    %v1599 = vunpack.c.l.b16 %v484
    %v1600 = vpack.c.b16 %v921, %v914
    %v1601 = vpack.c.b16 %v922, %v915
    %v1602 = vpack.c.b16 %v923, %v916
    %v1603 = vpack.c.b16 %v924, %v917
    %v1604 = vpack.c.b16 %v925, %v918
    %v1605 = vpack.c.b16 %v926, %v919
    %v1606 = vpack.c.b16 %v927, %v920
    %v1607 = vpack.c.b16 %v935, %v928
    %v1608 = vpack.c.b16 %v936, %v929
    %v1609 = vpack.c.b16 %v937, %v930
    %v1610 = vpack.c.b16 %v938, %v931
    %v1611 = vpack.c.b16 %v939, %v932
    %v1612 = vpack.c.b16 %v940, %v933
    %v1613 = vpack.c.b16 %v941, %v934
    %v1614 = vpack.c.b16 %v949, %v942
    %v1615 = vpack.c.b16 %v950, %v943
    %v1616 = vpack.c.b16 %v951, %v944
    %v1617 = vpack.c.b16 %v952, %v945
    %v1618 = vpack.c.b16 %v953, %v946
    %v1619 = vpack.c.b16 %v954, %v947
    %v1620 = vpack.c.b16 %v955, %v948
    %v1621 = vpack.c.b16 %v963, %v956
    %v1622 = vpack.c.b16 %v964, %v957
    %v1623 = vpack.c.b16 %v965, %v958
    %v1624 = vpack.c.b16 %v966, %v959
    %v1625 = vpack.c.b16 %v967, %v960
    %v1626 = vpack.c.b16 %v968, %v961
    %v1627 = vpack.c.b16 %v969, %v962
    %v1628 = vpack.c.b16 %v977, %v970
    %v1629 = vpack.c.b16 %v978, %v971
    %v1630 = vpack.c.b16 %v979, %v972
    %v1631 = vpack.c.b16 %v980, %v973
    %v1632 = vpack.c.b16 %v981, %v974
    %v1633 = vpack.c.b16 %v982, %v975
    %v1634 = vpack.c.b16 %v983, %v976
    %v1635 = vpack.c.b16 %v991, %v984
    %v1636 = vpack.c.b16 %v992, %v985
    %v1637 = vpack.c.b16 %v993, %v986
    %v1638 = vpack.c.b16 %v994, %v987
    %v1639 = vpack.c.b16 %v995, %v988
    %v1640 = vpack.c.b16 %v996, %v989
    %v1641 = vpack.c.b16 %v997, %v990
    %v1642 = vpack.c.b16 %v1005, %v998
    %v1643 = vpack.c.b16 %v1006, %v999
    %v1644 = vpack.c.b16 %v1007, %v1000
    %v1645 = vpack.c.b16 %v1008, %v1001
    %v1646 = vpack.c.b16 %v1009, %v1002
    %v1647 = vpack.c.b16 %v1010, %v1003
    %v1648 = vpack.c.b16 %v1011, %v1004
    %v1649 = vpack.c.b16 %v1019, %v1012
    %v1650 = vpack.c.b16 %v1020, %v1013
    %v1651 = vpack.c.b16 %v1021, %v1014
    %v1652 = vpack.c.b16 %v1022, %v1015
    %v1653 = vpack.c.b16 %v1023, %v1016
    %v1654 = vpack.c.b16 %v1024, %v1017
    %v1655 = vpack.c.b16 %v1025, %v1018
    %v1656 = vpack.c.b16 %v1033, %v1026
    %v1657 = vpack.c.b16 %v1034, %v1027
    %v1658 = vpack.c.b16 %v1035, %v1028
    %v1659 = vpack.c.b16 %v1036, %v1029
    %v1660 = vpack.c.b16 %v1037, %v1030
    %v1661 = vpack.c.b16 %v1038, %v1031
    %v1662 = vpack.c.b16 %v1039, %v1032
    %v1663 = vpack.c.b16 %v1047, %v1040
    %v1664 = vpack.c.b16 %v1048, %v1041
    %v1665 = vpack.c.b16 %v1049, %v1042
    %v1666 = vpack.c.b16 %v1050, %v1043
    %v1667 = vpack.c.b16 %v1051, %v1044
    %v1668 = vpack.c.b16 %v1052, %v1045
    %v1669 = vpack.c.b16 %v1053, %v1046
    %v1670 = vpack.c.b16 %v1061, %v1054
    %v1671 = vpack.c.b16 %v1062, %v1055
    %v1672 = vpack.c.b16 %v1063, %v1056
    %v1673 = vpack.c.b16 %v1064, %v1057
    %v1674 = vpack.c.b16 %v1065, %v1058
    %v1675 = vpack.c.b16 %v1066, %v1059
    %v1676 = vpack.c.b16 %v1067, %v1060
    %v1677 = vpack.c.b16 %v1075, %v1068
    %v1678 = vpack.c.b16 %v1076, %v1069
    %v1679 = vpack.c.b16 %v1077, %v1070
    %v1680 = vpack.c.b16 %v1078, %v1071
    %v1681 = vpack.c.b16 %v1079, %v1072
    %v1682 = vpack.c.b16 %v1080, %v1073
    %v1683 = vpack.c.b16 %v1081, %v1074
    %v1684 = vpack.c.b16 %v1089, %v1082
    %v1685 = vpack.c.b16 %v1090, %v1083
    %v1686 = vpack.c.b16 %v1091, %v1084
    %v1687 = vpack.c.b16 %v1092, %v1085
    %v1688 = vpack.c.b16 %v1093, %v1086
    %v1689 = vpack.c.b16 %v1094, %v1087
    %v1690 = vpack.c.b16 %v1095, %v1088
    %v1691 = vpack.c.b16 %v1103, %v1096
    %v1692 = vpack.c.b16 %v1104, %v1097
    %v1693 = vpack.c.b16 %v1105, %v1098
    %v1694 = vpack.c.b16 %v1106, %v1099
    %v1695 = vpack.c.b16 %v1107, %v1100
    %v1696 = vpack.c.b16 %v1108, %v1101
    %v1697 = vpack.c.b16 %v1109, %v1102
    %v1698 = vpack.c.b16 %v1117, %v1110
    %v1699 = vpack.c.b16 %v1118, %v1111
    %v1700 = vpack.c.b16 %v1119, %v1112
    %v1701 = vpack.c.b16 %v1120, %v1113
    %v1702 = vpack.c.b16 %v1121, %v1114
    %v1703 = vpack.c.b16 %v1122, %v1115
    %v1704 = vpack.c.b16 %v1123, %v1116
    %v1705 = vpack.c.b16 %v1131, %v1124
    %v1706 = vpack.c.b16 %v1132, %v1125
    %v1707 = vpack.c.b16 %v1133, %v1126
    %v1708 = vpack.c.b16 %v1134, %v1127
    %v1709 = vpack.c.b16 %v1135, %v1128
    %v1710 = vpack.c.b16 %v1136, %v1129
    %v1711 = vpack.c.b16 %v1137, %v1130
    %v1712 = vpack.c.b16 %v1145, %v1138
    %v1713 = vpack.c.b16 %v1146, %v1139
    %v1714 = vpack.c.b16 %v1147, %v1140
    %v1715 = vpack.c.b16 %v1148, %v1141
    %v1716 = vpack.c.b16 %v1149, %v1142
    %v1717 = vpack.c.b16 %v1150, %v1143
    %v1718 = vpack.c.b16 %v1151, %v1144
    %v1719 = vpack.c.b16 %v1159, %v1152
    %v1720 = vpack.c.b16 %v1160, %v1153
    %v1721 = vpack.c.b16 %v1161, %v1154
    %v1722 = vpack.c.b16 %v1162, %v1155
    %v1723 = vpack.c.b16 %v1163, %v1156
    %v1724 = vpack.c.b16 %v1164, %v1157
    %v1725 = vpack.c.b16 %v1165, %v1158
    %v1726 = vpack.c.b16 %v1173, %v1166
    %v1727 = vpack.c.b16 %v1174, %v1167
    %v1728 = vpack.c.b16 %v1175, %v1168
    %v1729 = vpack.c.b16 %v1176, %v1169
    %v1730 = vpack.c.b16 %v1177, %v1170
    %v1731 = vpack.c.b16 %v1178, %v1171
    %v1732 = vpack.c.b16 %v1179, %v1172
    %v1733 = vpack.c.b16 %v1187, %v1180
    %v1734 = vpack.c.b16 %v1188, %v1181
    %v1735 = vpack.c.b16 %v1189, %v1182
    %v1736 = vpack.c.b16 %v1190, %v1183
    %v1737 = vpack.c.b16 %v1191, %v1184
    %v1738 = vpack.c.b16 %v1192, %v1185
    %v1739 = vpack.c.b16 %v1193, %v1186
    %v1740 = vpack.c.b16 %v1201, %v1194
    %v1741 = vpack.c.b16 %v1202, %v1195
    %v1742 = vpack.c.b16 %v1203, %v1196
    %v1743 = vpack.c.b16 %v1204, %v1197
    %v1744 = vpack.c.b16 %v1205, %v1198
    %v1745 = vpack.c.b16 %v1206, %v1199
    %v1746 = vpack.c.b16 %v1207, %v1200
    %v1747 = vpack.c.b16 %v1215, %v1208
    %v1748 = vpack.c.b16 %v1216, %v1209
    %v1749 = vpack.c.b16 %v1217, %v1210
    %v1750 = vpack.c.b16 %v1218, %v1211
    %v1751 = vpack.c.b16 %v1219, %v1212
    %v1752 = vpack.c.b16 %v1220, %v1213
    %v1753 = vpack.c.b16 %v1221, %v1214
    %v1754 = vpack.c.b16 %v1229, %v1222
    %v1755 = vpack.c.b16 %v1230, %v1223
    %v1756 = vpack.c.b16 %v1231, %v1224
    %v1757 = vpack.c.b16 %v1232, %v1225
    %v1758 = vpack.c.b16 %v1233, %v1226
    %v1759 = vpack.c.b16 %v1234, %v1227
    %v1760 = vpack.c.b16 %v1235, %v1228
    %v1761 = vpack.c.b16 %v1243, %v1236
    %v1762 = vpack.c.b16 %v1244, %v1237
    %v1763 = vpack.c.b16 %v1245, %v1238
    %v1764 = vpack.c.b16 %v1246, %v1239
    %v1765 = vpack.c.b16 %v1247, %v1240
    %v1766 = vpack.c.b16 %v1248, %v1241
    %v1767 = vpack.c.b16 %v1249, %v1242
    %v1768 = vpack.c.b16 %v1257, %v1250
    %v1769 = vpack.c.b16 %v1258, %v1251
    %v1770 = vpack.c.b16 %v1259, %v1252
    %v1771 = vpack.c.b16 %v1260, %v1253
    %v1772 = vpack.c.b16 %v1261, %v1254
    %v1773 = vpack.c.b16 %v1262, %v1255
    %v1774 = vpack.c.b16 %v1263, %v1256
    %v1775 = vpack.c.b16 %v1271, %v1264
    %v1776 = vpack.c.b16 %v1272, %v1265
    %v1777 = vpack.c.b16 %v1273, %v1266
    %v1778 = vpack.c.b16 %v1274, %v1267
    %v1779 = vpack.c.b16 %v1275, %v1268
    %v1780 = vpack.c.b16 %v1276, %v1269
    %v1781 = vpack.c.b16 %v1277, %v1270
    %v1782 = vpack.c.b16 %v1285, %v1278
    %v1783 = vpack.c.b16 %v1286, %v1279
    %v1784 = vpack.c.b16 %v1287, %v1280
    %v1785 = vpack.c.b16 %v1288, %v1281
    %v1786 = vpack.c.b16 %v1289, %v1282
    %v1787 = vpack.c.b16 %v1290, %v1283
    %v1788 = vpack.c.b16 %v1291, %v1284
    %v1789 = vpack.c.b16 %v1299, %v1292
    %v1790 = vpack.c.b16 %v1300, %v1293
    %v1791 = vpack.c.b16 %v1301, %v1294
    %v1792 = vpack.c.b16 %v1302, %v1295
    %v1793 = vpack.c.b16 %v1303, %v1296
    %v1794 = vpack.c.b16 %v1304, %v1297
    %v1795 = vpack.c.b16 %v1305, %v1298
    %v1796 = vpack.c.b16 %v1313, %v1306
    %v1797 = vpack.c.b16 %v1314, %v1307
    %v1798 = vpack.c.b16 %v1315, %v1308
    %v1799 = vpack.c.b16 %v1316, %v1309
    %v1800 = vpack.c.b16 %v1317, %v1310
    %v1801 = vpack.c.b16 %v1318, %v1311
    %v1802 = vpack.c.b16 %v1319, %v1312
    %v1803 = vpack.c.b16 %v1327, %v1320
    %v1804 = vpack.c.b16 %v1328, %v1321
    %v1805 = vpack.c.b16 %v1329, %v1322
    %v1806 = vpack.c.b16 %v1330, %v1323
    %v1807 = vpack.c.b16 %v1331, %v1324
    %v1808 = vpack.c.b16 %v1332, %v1325
    %v1809 = vpack.c.b16 %v1333, %v1326
    %v1810 = vpack.c.b16 %v1341, %v1334
    %v1811 = vpack.c.b16 %v1342, %v1335
    %v1812 = vpack.c.b16 %v1343, %v1336
    %v1813 = vpack.c.b16 %v1344, %v1337
    %v1814 = vpack.c.b16 %v1345, %v1338
    %v1815 = vpack.c.b16 %v1346, %v1339
    %v1816 = vpack.c.b16 %v1347, %v1340
    %v1817 = vpack.c.b16 %v1355, %v1348
    %v1818 = vpack.c.b16 %v1356, %v1349
    %v1819 = vpack.c.b16 %v1357, %v1350
    %v1820 = vpack.c.b16 %v1358, %v1351
    %v1821 = vpack.c.b16 %v1359, %v1352
    %v1822 = vpack.c.b16 %v1360, %v1353
    %v1823 = vpack.c.b16 %v1361, %v1354
    %v1824 = vpack.c.b16 %v1369, %v1362
    %v1825 = vpack.c.b16 %v1370, %v1363
    %v1826 = vpack.c.b16 %v1371, %v1364
    %v1827 = vpack.c.b16 %v1372, %v1365
    %v1828 = vpack.c.b16 %v1373, %v1366
    %v1829 = vpack.c.b16 %v1374, %v1367
    %v1830 = vpack.c.b16 %v1375, %v1368
    %v1831 = vpack.c.b16 %v1383, %v1376
    %v1832 = vpack.c.b16 %v1384, %v1377
    %v1833 = vpack.c.b16 %v1385, %v1378
    %v1834 = vpack.c.b16 %v1386, %v1379
    %v1835 = vpack.c.b16 %v1387, %v1380
    %v1836 = vpack.c.b16 %v1388, %v1381
    %v1837 = vpack.c.b16 %v1389, %v1382
    %v1838 = vpack.c.b16 %v1397, %v1390
    %v1839 = vpack.c.b16 %v1398, %v1391
    %v1840 = vpack.c.b16 %v1399, %v1392
    %v1841 = vpack.c.b16 %v1400, %v1393
    %v1842 = vpack.c.b16 %v1401, %v1394
    %v1843 = vpack.c.b16 %v1402, %v1395
    %v1844 = vpack.c.b16 %v1403, %v1396
    %v1845 = vpack.c.b16 %v1411, %v1404
    %v1846 = vpack.c.b16 %v1412, %v1405
    %v1847 = vpack.c.b16 %v1413, %v1406
    %v1848 = vpack.c.b16 %v1414, %v1407
    %v1849 = vpack.c.b16 %v1415, %v1408
    %v1850 = vpack.c.b16 %v1416, %v1409
    %v1851 = vpack.c.b16 %v1417, %v1410
    %v1852 = vpack.c.b16 %v1425, %v1418
    %v1853 = vpack.c.b16 %v1426, %v1419
    %v1854 = vpack.c.b16 %v1427, %v1420
    %v1855 = vpack.c.b16 %v1428, %v1421
    %v1856 = vpack.c.b16 %v1429, %v1422
    %v1857 = vpack.c.b16 %v1430, %v1423
    %v1858 = vpack.c.b16 %v1431, %v1424
    %v1859 = vpack.c.b16 %v1439, %v1432
    %v1860 = vpack.c.b16 %v1440, %v1433
    %v1861 = vpack.c.b16 %v1441, %v1434
    %v1862 = vpack.c.b16 %v1442, %v1435
    %v1863 = vpack.c.b16 %v1443, %v1436
    %v1864 = vpack.c.b16 %v1444, %v1437
    %v1865 = vpack.c.b16 %v1445, %v1438
    %v1866 = vpack.c.b16 %v1453, %v1446
    %v1867 = vpack.c.b16 %v1454, %v1447
    %v1868 = vpack.c.b16 %v1455, %v1448
    %v1869 = vpack.c.b16 %v1456, %v1449
    %v1870 = vpack.c.b16 %v1457, %v1450
    %v1871 = vpack.c.b16 %v1458, %v1451
    %v1872 = vpack.c.b16 %v1459, %v1452
    %v1873 = vpack.c.b16 %v1467, %v1460
    %v1874 = vpack.c.b16 %v1468, %v1461
    %v1875 = vpack.c.b16 %v1469, %v1462
    %v1876 = vpack.c.b16 %v1470, %v1463
    %v1877 = vpack.c.b16 %v1471, %v1464
    %v1878 = vpack.c.b16 %v1472, %v1465
    %v1879 = vpack.c.b16 %v1473, %v1466
    %v1880 = vpack.c.b16 %v1481, %v1474
    %v1881 = vpack.c.b16 %v1482, %v1475
    %v1882 = vpack.c.b16 %v1483, %v1476
    %v1883 = vpack.c.b16 %v1484, %v1477
    %v1884 = vpack.c.b16 %v1485, %v1478
    %v1885 = vpack.c.b16 %v1486, %v1479
    %v1886 = vpack.c.b16 %v1487, %v1480
    %v1887 = vpack.c.b16 %v1495, %v1488
    %v1888 = vpack.c.b16 %v1496, %v1489
    %v1889 = vpack.c.b16 %v1497, %v1490
    %v1890 = vpack.c.b16 %v1498, %v1491
    %v1891 = vpack.c.b16 %v1499, %v1492
    %v1892 = vpack.c.b16 %v1500, %v1493
    %v1893 = vpack.c.b16 %v1501, %v1494
    %v1894 = vpack.c.b16 %v1509, %v1502
    %v1895 = vpack.c.b16 %v1510, %v1503
    %v1896 = vpack.c.b16 %v1511, %v1504
    %v1897 = vpack.c.b16 %v1512, %v1505
    %v1898 = vpack.c.b16 %v1513, %v1506
    %v1899 = vpack.c.b16 %v1514, %v1507
    %v1900 = vpack.c.b16 %v1515, %v1508
    %v1901 = vpack.c.b16 %v1523, %v1516
    %v1902 = vpack.c.b16 %v1524, %v1517
    %v1903 = vpack.c.b16 %v1525, %v1518
    %v1904 = vpack.c.b16 %v1526, %v1519
    %v1905 = vpack.c.b16 %v1527, %v1520
    %v1906 = vpack.c.b16 %v1528, %v1521
    %v1907 = vpack.c.b16 %v1529, %v1522
    %v1908 = vpack.c.b16 %v1537, %v1530
    %v1909 = vpack.c.b16 %v1538, %v1531
    %v1910 = vpack.c.b16 %v1539, %v1532
    %v1911 = vpack.c.b16 %v1540, %v1533
    %v1912 = vpack.c.b16 %v1541, %v1534
    %v1913 = vpack.c.b16 %v1542, %v1535
    %v1914 = vpack.c.b16 %v1543, %v1536
    %v1915 = vpack.c.b16 %v1551, %v1544
    %v1916 = vpack.c.b16 %v1552, %v1545
    %v1917 = vpack.c.b16 %v1553, %v1546
    %v1918 = vpack.c.b16 %v1554, %v1547
    %v1919 = vpack.c.b16 %v1555, %v1548
    %v1920 = vpack.c.b16 %v1556, %v1549
    %v1921 = vpack.c.b16 %v1557, %v1550
    %v1922 = vpack.c.b16 %v1565, %v1558
    %v1923 = vpack.c.b16 %v1566, %v1559
    %v1924 = vpack.c.b16 %v1567, %v1560
    %v1925 = vpack.c.b16 %v1568, %v1561
    %v1926 = vpack.c.b16 %v1569, %v1562
    %v1927 = vpack.c.b16 %v1570, %v1563
    %v1928 = vpack.c.b16 %v1571, %v1564
    %v1929 = vpack.c.b16 %v1579, %v1572
    %v1930 = vpack.c.b16 %v1580, %v1573
    %v1931 = vpack.c.b16 %v1581, %v1574
    %v1932 = vpack.c.b16 %v1582, %v1575
    %v1933 = vpack.c.b16 %v1583, %v1576
    %v1934 = vpack.c.b16 %v1584, %v1577
    %v1935 = vpack.c.b16 %v1585, %v1578
    %v1936 = vpack.c.b16 %v1593, %v1586
    %v1937 = vpack.c.b16 %v1594, %v1587
    %v1938 = vpack.c.b16 %v1595, %v1588
    %v1939 = vpack.c.b16 %v1596, %v1589
    %v1940 = vpack.c.b16 %v1597, %v1590
    %v1941 = vpack.c.b16 %v1598, %v1591
    %v1942 = vpack.c.b16 %v1599, %v1592
    %vm2286 = vcmask 130048
    %v2288 = vsel %vm2286, %v92, 0
    %2290 = vmatprep.subr.bf16.mxu0 %v1601
    %2291 = vmatpush1.bf16.msra.mxu0 %v1600
    %2292 = vmatprep.subr.bf16.mxu0 %v1608
    %2293 = vmatpush1.bf16.msra.mxu0 %v1607
    %2294 = vmatprep.subr.bf16.mxu0 %v1615
    %2295 = vmatpush1.bf16.msra.mxu0 %v1614
    %2296 = vmatprep.subr.bf16.mxu0 %v1622
    %2297 = vmatpush1.bf16.msra.mxu0 %v1621
    %2298 = vmatprep.subr.bf16.mxu0 %v1629
    %2299 = vmatpush1.bf16.msra.mxu0 %v1628
    %2300 = vmatprep.subr.bf16.mxu0 %v1636
    %2301 = vmatpush1.bf16.msra.mxu0 %v1635
    %2302 = vmatprep.subr.bf16.mxu0 %v1643
    %2303 = vmatpush1.bf16.msra.mxu0 %v1642
    %2304 = vmatprep.subr.bf16.mxu0 %v1650
    %2305 = vmatpush1.bf16.msra.mxu0 %v1649
    %2306 = vmatprep.subr.bf16.mxu0 %v1657
    %2307 = vmatpush1.bf16.msra.mxu0 %v1656
    %2308 = vmatprep.subr.bf16.mxu0 %v1664
    %2309 = vmatpush1.bf16.msra.mxu0 %v1663
    %2310 = vmatprep.subr.bf16.mxu0 %v1671
    %2311 = vmatpush1.bf16.msra.mxu0 %v1670
    %2312 = vmatprep.subr.bf16.mxu0 %v1678
    %2313 = vmatpush1.bf16.msra.mxu0 %v1677
    %2314 = vmatprep.subr.bf16.mxu0 %v1685
    %2315 = vmatpush1.bf16.msra.mxu0 %v1684
    %2316 = vmatprep.subr.bf16.mxu0 %v1692
    %2317 = vmatpush1.bf16.msra.mxu0 %v1691
    %2318 = vmatprep.subr.bf16.mxu0 %v1699
    %2319 = vmatpush1.bf16.msra.mxu0 %v1698
    %2320 = vmatprep.subr.bf16.mxu0 %v1706
    %2321 = vmatpush1.bf16.msra.mxu0 %v1705
    %2322 = vmatprep.mubr.bf16.mxu0 %v87
    %2323 = vmatmul.mubr.bf16.gmra.mrb[0].mxu0 %v86
    %v2324 = vpop.f32.mrb[0].mxu0
    %v2325 = vadd.f32 %v490, %v2324
    %v2326 = vpop.f32.mrb[0].mxu0
    %v2327 = vadd.f32 %v494, %v2326
    %v2328 = vpop.f32.mrb[0].mxu0
    %v2329 = vadd.f32 %v490, %v2328
    %v2330 = vpop.f32.mrb[0].mxu0
    %v2331 = vadd.f32 %v494, %v2330
    %2332 = vdwg.mxu0
    %2333 = vmatprep.subr.bf16.mxu0 %v1713
    %2334 = vmatpush1.bf16.msra.mxu0 %v1712
    %2335 = vmatprep.subr.bf16.mxu0 %v1720
    %2336 = vmatpush1.bf16.msra.mxu0 %v1719
    %2337 = vmatprep.subr.bf16.mxu0 %v1727
    %2338 = vmatpush1.bf16.msra.mxu0 %v1726
    %2339 = vmatprep.subr.bf16.mxu0 %v1734
    %2340 = vmatpush1.bf16.msra.mxu0 %v1733
    %2341 = vmatprep.subr.bf16.mxu0 %v1741
    %2342 = vmatpush1.bf16.msra.mxu0 %v1740
    %2343 = vmatprep.subr.bf16.mxu0 %v1748
    %2344 = vmatpush1.bf16.msra.mxu0 %v1747
    %2345 = vmatprep.subr.bf16.mxu0 %v1755
    %2346 = vmatpush1.bf16.msra.mxu0 %v1754
    %2347 = vmatprep.subr.bf16.mxu0 %v1762
    %2348 = vmatpush1.bf16.msra.mxu0 %v1761
    %2349 = vmatprep.subr.bf16.mxu0 %v1769
    %2350 = vmatpush1.bf16.msra.mxu0 %v1768
    %2351 = vmatprep.subr.bf16.mxu0 %v1776
    %2352 = vmatpush1.bf16.msra.mxu0 %v1775
    %2353 = vmatprep.subr.bf16.mxu0 %v1783
    %2354 = vmatpush1.bf16.msra.mxu0 %v1782
    %2355 = vmatprep.subr.bf16.mxu0 %v1790
    %2356 = vmatpush1.bf16.msra.mxu0 %v1789
    %2357 = vmatprep.subr.bf16.mxu0 %v1797
    %2358 = vmatpush1.bf16.msra.mxu0 %v1796
    %2359 = vmatprep.subr.bf16.mxu0 %v1804
    %2360 = vmatpush1.bf16.msra.mxu0 %v1803
    %2361 = vmatprep.subr.bf16.mxu0 %v1811
    %2362 = vmatpush1.bf16.msra.mxu0 %v1810
    %2363 = vmatprep.subr.bf16.mxu0 %v1818
    %2364 = vmatpush1.bf16.msra.mxu0 %v1817
    %2365 = vmatprep.mubr.bf16.mxu0 %v89
    %2366 = vmatmul.mubr.bf16.gmra.mrb[0].mxu0 %v88
    %v2367 = vpop.f32.mrb[0].mxu0
    %v2368 = vadd.f32 %v2325, %v2367
    %v2369 = vpop.f32.mrb[0].mxu0
    %v2370 = vadd.f32 %v2327, %v2369
    %v2371 = vpop.f32.mrb[0].mxu0
    %v2372 = vadd.f32 %v2329, %v2371
    %v2373 = vpop.f32.mrb[0].mxu0
    %v2374 = vadd.f32 %v2331, %v2373
    %2375 = vdwg.mxu0
    %2376 = vmatprep.subr.bf16.mxu0 %v1825
    %2377 = vmatpush1.bf16.msra.mxu0 %v1824
    %2378 = vmatprep.subr.bf16.mxu0 %v1832
    %2379 = vmatpush1.bf16.msra.mxu0 %v1831
    %2380 = vmatprep.subr.bf16.mxu0 %v1839
    %2381 = vmatpush1.bf16.msra.mxu0 %v1838
    %2382 = vmatprep.subr.bf16.mxu0 %v1846
    %2383 = vmatpush1.bf16.msra.mxu0 %v1845
    %2384 = vmatprep.subr.bf16.mxu0 %v1853
    %2385 = vmatpush1.bf16.msra.mxu0 %v1852
    %2386 = vmatprep.subr.bf16.mxu0 %v1860
    %2387 = vmatpush1.bf16.msra.mxu0 %v1859
    %2388 = vmatprep.subr.bf16.mxu0 %v1867
    %2389 = vmatpush1.bf16.msra.mxu0 %v1866
    %2390 = vmatprep.subr.bf16.mxu0 %v1874
    %2391 = vmatpush1.bf16.msra.mxu0 %v1873
    %2392 = vmatprep.subr.bf16.mxu0 %v1881
    %2393 = vmatpush1.bf16.msra.mxu0 %v1880
    %2394 = vmatprep.subr.bf16.mxu0 %v1888
    %2395 = vmatpush1.bf16.msra.mxu0 %v1887
    %2396 = vmatprep.subr.bf16.mxu0 %v1895
    %2397 = vmatpush1.bf16.msra.mxu0 %v1894
    %2398 = vmatprep.subr.bf16.mxu0 %v1902
    %2399 = vmatpush1.bf16.msra.mxu0 %v1901
    %2400 = vmatprep.subr.bf16.mxu0 %v1909
    %2401 = vmatpush1.bf16.msra.mxu0 %v1908
    %2402 = vmatprep.subr.bf16.mxu0 %v1916
    %2403 = vmatpush1.bf16.msra.mxu0 %v1915
    %2404 = vmatprep.subr.bf16.mxu0 %v1923
    %2405 = vmatpush1.bf16.msra.mxu0 %v1922
    %2406 = vmatprep.subr.bf16.mxu0 %v1930
    %2407 = vmatpush1.bf16.msra.mxu0 %v1929
    %2408 = vmatprep.mubr.bf16.mxu0 %v91
    %2409 = vmatmul.mubr.bf16.gmra.mrb[0].mxu0 %v90
    %v2410 = vpop.f32.mrb[0].mxu0
    %v2411 = vadd.f32 %v2368, %v2410
    %v2412 = vpop.f32.mrb[0].mxu0
    %v2413 = vadd.f32 %v2370, %v2412
    %v2414 = vpop.f32.mrb[0].mxu0
    %v2415 = vadd.f32 %v2372, %v2414
    %v2416 = vpop.f32.mrb[0].mxu0
    %v2417 = vadd.f32 %v2374, %v2416
    %2418 = vdwg.mxu0
    %2419 = vmatprep.subr.bf16.mxu0 %v1937
    %2420 = vmatpush1.bf16.msra.mxu0 %v1936
    %2421 = vmatprep.subr.bf16.mxu0 0
    %2422 = vmatpush1.bf16.msra.mxu0 0
    %2423 = vmatprep.subr.bf16.mxu0 0
    %2424 = vmatpush1.bf16.msra.mxu0 0
    %2425 = vmatprep.subr.bf16.mxu0 0
    %2426 = vmatpush1.bf16.msra.mxu0 0
    %2427 = vmatprep.subr.bf16.mxu0 0
    %2428 = vmatpush1.bf16.msra.mxu0 0
    %2429 = vmatprep.subr.bf16.mxu0 0
    %2430 = vmatpush1.bf16.msra.mxu0 0
    %2431 = vmatprep.subr.bf16.mxu0 0
    %2432 = vmatpush1.bf16.msra.mxu0 0
    %2433 = vmatprep.subr.bf16.mxu0 0
    %2434 = vmatpush1.bf16.msra.mxu0 0
    %2435 = vmatprep.subr.bf16.mxu0 0
    %2436 = vmatpush1.bf16.msra.mxu0 0
    %2437 = vmatprep.subr.bf16.mxu0 0
    %2438 = vmatpush1.bf16.msra.mxu0 0
    %2439 = vmatprep.subr.bf16.mxu0 0
    %2440 = vmatpush1.bf16.msra.mxu0 0
    %2441 = vmatprep.subr.bf16.mxu0 0
    %2442 = vmatpush1.bf16.msra.mxu0 0
    %2443 = vmatprep.subr.bf16.mxu0 0
    %2444 = vmatpush1.bf16.msra.mxu0 0
    %2445 = vmatprep.subr.bf16.mxu0 0
    %2446 = vmatpush1.bf16.msra.mxu0 0
    %2447 = vmatprep.subr.bf16.mxu0 0
    %2448 = vmatpush1.bf16.msra.mxu0 0
    %2449 = vmatprep.subr.bf16.mxu0 0
    %2450 = vmatpush1.bf16.msra.mxu0 0
    %2451 = vmatprep.mubr.bf16.mxu0 0
    %2452 = vmatmul.mubr.bf16.gmra.mrb[0].mxu0 %v2288
    %v2453 = vpop.f32.mrb[0].mxu0
    %v2454 = vadd.f32 %v2411, %v2453
    %v2455 = vpop.f32.mrb[0].mxu0
    %v2456 = vadd.f32 %v2413, %v2455
    %v2457 = vpop.f32.mrb[0].mxu0
    %v2458 = vadd.f32 %v2415, %v2457
    %v2459 = vpop.f32.mrb[0].mxu0
    %v2460 = vadd.f32 %v2417, %v2459
    %2461 = vdwg.mxu0
    %2462 = vmatprep.subr.bf16.mxu0 %v1603
    %2463 = vmatpush1.bf16.msra.mxu0 %v1602
    %2464 = vmatprep.subr.bf16.mxu0 %v1610
    %2465 = vmatpush1.bf16.msra.mxu0 %v1609
    %2466 = vmatprep.subr.bf16.mxu0 %v1617
    %2467 = vmatpush1.bf16.msra.mxu0 %v1616
    %2468 = vmatprep.subr.bf16.mxu0 %v1624
    %2469 = vmatpush1.bf16.msra.mxu0 %v1623
    %2470 = vmatprep.subr.bf16.mxu0 %v1631
    %2471 = vmatpush1.bf16.msra.mxu0 %v1630
    %2472 = vmatprep.subr.bf16.mxu0 %v1638
    %2473 = vmatpush1.bf16.msra.mxu0 %v1637
    %2474 = vmatprep.subr.bf16.mxu0 %v1645
    %2475 = vmatpush1.bf16.msra.mxu0 %v1644
    %2476 = vmatprep.subr.bf16.mxu0 %v1652
    %2477 = vmatpush1.bf16.msra.mxu0 %v1651
    %2478 = vmatprep.subr.bf16.mxu0 %v1659
    %2479 = vmatpush1.bf16.msra.mxu0 %v1658
    %2480 = vmatprep.subr.bf16.mxu0 %v1666
    %2481 = vmatpush1.bf16.msra.mxu0 %v1665
    %2482 = vmatprep.subr.bf16.mxu0 %v1673
    %2483 = vmatpush1.bf16.msra.mxu0 %v1672
    %2484 = vmatprep.subr.bf16.mxu0 %v1680
    %2485 = vmatpush1.bf16.msra.mxu0 %v1679
    %2486 = vmatprep.subr.bf16.mxu0 %v1687
    %2487 = vmatpush1.bf16.msra.mxu0 %v1686
    %2488 = vmatprep.subr.bf16.mxu0 %v1694
    %2489 = vmatpush1.bf16.msra.mxu0 %v1693
    %2490 = vmatprep.subr.bf16.mxu0 %v1701
    %2491 = vmatpush1.bf16.msra.mxu0 %v1700
    %2492 = vmatprep.subr.bf16.mxu0 %v1708
    %2493 = vmatpush1.bf16.msra.mxu0 %v1707
    %2494 = vmatprep.mubr.bf16.mxu0 %v87
    %2495 = vmatmul.mubr.bf16.gmra.mrb[0].mxu0 %v86
    %v2496 = vpop.f32.mrb[0].mxu0
    %v2497 = vadd.f32 %v498, %v2496
    %v2498 = vpop.f32.mrb[0].mxu0
    %v2499 = vadd.f32 %v502, %v2498
    %v2500 = vpop.f32.mrb[0].mxu0
    %v2501 = vadd.f32 %v498, %v2500
    %v2502 = vpop.f32.mrb[0].mxu0
    %v2503 = vadd.f32 %v502, %v2502
    %2504 = vdwg.mxu0
    %2505 = vmatprep.subr.bf16.mxu0 %v1715
    %2506 = vmatpush1.bf16.msra.mxu0 %v1714
    %2507 = vmatprep.subr.bf16.mxu0 %v1722
    %2508 = vmatpush1.bf16.msra.mxu0 %v1721
    %2509 = vmatprep.subr.bf16.mxu0 %v1729
    %2510 = vmatpush1.bf16.msra.mxu0 %v1728
    %2511 = vmatprep.subr.bf16.mxu0 %v1736
    %2512 = vmatpush1.bf16.msra.mxu0 %v1735
    %2513 = vmatprep.subr.bf16.mxu0 %v1743
    %2514 = vmatpush1.bf16.msra.mxu0 %v1742
    %2515 = vmatprep.subr.bf16.mxu0 %v1750
    %2516 = vmatpush1.bf16.msra.mxu0 %v1749
    %2517 = vmatprep.subr.bf16.mxu0 %v1757
    %2518 = vmatpush1.bf16.msra.mxu0 %v1756
    %2519 = vmatprep.subr.bf16.mxu0 %v1764
    %2520 = vmatpush1.bf16.msra.mxu0 %v1763
    %2521 = vmatprep.subr.bf16.mxu0 %v1771
    %2522 = vmatpush1.bf16.msra.mxu0 %v1770
    %2523 = vmatprep.subr.bf16.mxu0 %v1778
    %2524 = vmatpush1.bf16.msra.mxu0 %v1777
    %2525 = vmatprep.subr.bf16.mxu0 %v1785
    %2526 = vmatpush1.bf16.msra.mxu0 %v1784
    %2527 = vmatprep.subr.bf16.mxu0 %v1792
    %2528 = vmatpush1.bf16.msra.mxu0 %v1791
    %2529 = vmatprep.subr.bf16.mxu0 %v1799
    %2530 = vmatpush1.bf16.msra.mxu0 %v1798
    %2531 = vmatprep.subr.bf16.mxu0 %v1806
    %2532 = vmatpush1.bf16.msra.mxu0 %v1805
    %2533 = vmatprep.subr.bf16.mxu0 %v1813
    %2534 = vmatpush1.bf16.msra.mxu0 %v1812
    %2535 = vmatprep.subr.bf16.mxu0 %v1820
    %2536 = vmatpush1.bf16.msra.mxu0 %v1819
    %2537 = vmatprep.mubr.bf16.mxu0 %v89
    %2538 = vmatmul.mubr.bf16.gmra.mrb[0].mxu0 %v88
    %v2539 = vpop.f32.mrb[0].mxu0
    %v2540 = vadd.f32 %v2497, %v2539
    %v2541 = vpop.f32.mrb[0].mxu0
    %v2542 = vadd.f32 %v2499, %v2541
    %v2543 = vpop.f32.mrb[0].mxu0
    %v2544 = vadd.f32 %v2501, %v2543
    %v2545 = vpop.f32.mrb[0].mxu0
    %v2546 = vadd.f32 %v2503, %v2545
    %2547 = vdwg.mxu0
    %2548 = vmatprep.subr.bf16.mxu0 %v1827
    %2549 = vmatpush1.bf16.msra.mxu0 %v1826
    %2550 = vmatprep.subr.bf16.mxu0 %v1834
    %2551 = vmatpush1.bf16.msra.mxu0 %v1833
    %2552 = vmatprep.subr.bf16.mxu0 %v1841
    %2553 = vmatpush1.bf16.msra.mxu0 %v1840
    %2554 = vmatprep.subr.bf16.mxu0 %v1848
    %2555 = vmatpush1.bf16.msra.mxu0 %v1847
    %2556 = vmatprep.subr.bf16.mxu0 %v1855
    %2557 = vmatpush1.bf16.msra.mxu0 %v1854
    %2558 = vmatprep.subr.bf16.mxu0 %v1862
    %2559 = vmatpush1.bf16.msra.mxu0 %v1861
    %2560 = vmatprep.subr.bf16.mxu0 %v1869
    %2561 = vmatpush1.bf16.msra.mxu0 %v1868
    %2562 = vmatprep.subr.bf16.mxu0 %v1876
    %2563 = vmatpush1.bf16.msra.mxu0 %v1875
    %2564 = vmatprep.subr.bf16.mxu0 %v1883
    %2565 = vmatpush1.bf16.msra.mxu0 %v1882
    %2566 = vmatprep.subr.bf16.mxu0 %v1890
    %2567 = vmatpush1.bf16.msra.mxu0 %v1889
    %2568 = vmatprep.subr.bf16.mxu0 %v1897
    %2569 = vmatpush1.bf16.msra.mxu0 %v1896
    %2570 = vmatprep.subr.bf16.mxu0 %v1904
    %2571 = vmatpush1.bf16.msra.mxu0 %v1903
    %2572 = vmatprep.subr.bf16.mxu0 %v1911
    %2573 = vmatpush1.bf16.msra.mxu0 %v1910
    %2574 = vmatprep.subr.bf16.mxu0 %v1918
    %2575 = vmatpush1.bf16.msra.mxu0 %v1917
    %2576 = vmatprep.subr.bf16.mxu0 %v1925
    %2577 = vmatpush1.bf16.msra.mxu0 %v1924
    %2578 = vmatprep.subr.bf16.mxu0 %v1932
    %2579 = vmatpush1.bf16.msra.mxu0 %v1931
    %2580 = vmatprep.mubr.bf16.mxu0 %v91
    %2581 = vmatmul.mubr.bf16.gmra.mrb[0].mxu0 %v90
    %v2582 = vpop.f32.mrb[0].mxu0
    %v2583 = vadd.f32 %v2540, %v2582
    %v2584 = vpop.f32.mrb[0].mxu0
    %v2585 = vadd.f32 %v2542, %v2584
    %v2586 = vpop.f32.mrb[0].mxu0
    %v2587 = vadd.f32 %v2544, %v2586
    %v2588 = vpop.f32.mrb[0].mxu0
    %v2589 = vadd.f32 %v2546, %v2588
    %2590 = vdwg.mxu0
    %2591 = vmatprep.subr.bf16.mxu0 %v1939
    %2592 = vmatpush1.bf16.msra.mxu0 %v1938
    %2593 = vmatprep.subr.bf16.mxu0 0
    %2594 = vmatpush1.bf16.msra.mxu0 0
    %2595 = vmatprep.subr.bf16.mxu0 0
    %2596 = vmatpush1.bf16.msra.mxu0 0
    %2597 = vmatprep.subr.bf16.mxu0 0
    %2598 = vmatpush1.bf16.msra.mxu0 0
    %2599 = vmatprep.subr.bf16.mxu0 0
    %2600 = vmatpush1.bf16.msra.mxu0 0
    %2601 = vmatprep.subr.bf16.mxu0 0
    %2602 = vmatpush1.bf16.msra.mxu0 0
    %2603 = vmatprep.subr.bf16.mxu0 0
    %2604 = vmatpush1.bf16.msra.mxu0 0
    %2605 = vmatprep.subr.bf16.mxu0 0
    %2606 = vmatpush1.bf16.msra.mxu0 0
    %2607 = vmatprep.subr.bf16.mxu0 0
    %2608 = vmatpush1.bf16.msra.mxu0 0
    %2609 = vmatprep.subr.bf16.mxu0 0
    %2610 = vmatpush1.bf16.msra.mxu0 0
    %2611 = vmatprep.subr.bf16.mxu0 0
    %2612 = vmatpush1.bf16.msra.mxu0 0
    %2613 = vmatprep.subr.bf16.mxu0 0
    %2614 = vmatpush1.bf16.msra.mxu0 0
    %2615 = vmatprep.subr.bf16.mxu0 0
    %2616 = vmatpush1.bf16.msra.mxu0 0
    %2617 = vmatprep.subr.bf16.mxu0 0
    %2618 = vmatpush1.bf16.msra.mxu0 0
    %2619 = vmatprep.subr.bf16.mxu0 0
    %2620 = vmatpush1.bf16.msra.mxu0 0
    %2621 = vmatprep.subr.bf16.mxu0 0
    %2622 = vmatpush1.bf16.msra.mxu0 0
    %2623 = vmatprep.mubr.bf16.mxu0 0
    %2624 = vmatmul.mubr.bf16.gmra.mrb[0].mxu0 %v2288
    %v2625 = vpop.f32.mrb[0].mxu0
    %v2626 = vadd.f32 %v2583, %v2625
    %v2627 = vpop.f32.mrb[0].mxu0
    %v2628 = vadd.f32 %v2585, %v2627
    %v2629 = vpop.f32.mrb[0].mxu0
    %v2630 = vadd.f32 %v2587, %v2629
    %v2631 = vpop.f32.mrb[0].mxu0
    %v2632 = vadd.f32 %v2589, %v2631
    %2633 = vdwg.mxu0
    %2634 = vmatprep.subr.bf16.mxu0 %v1605
    %2635 = vmatpush1.bf16.msra.mxu0 %v1604
    %2636 = vmatprep.subr.bf16.mxu0 %v1612
    %2637 = vmatpush1.bf16.msra.mxu0 %v1611
    %2638 = vmatprep.subr.bf16.mxu0 %v1619
    %2639 = vmatpush1.bf16.msra.mxu0 %v1618
    %2640 = vmatprep.subr.bf16.mxu0 %v1626
    %2641 = vmatpush1.bf16.msra.mxu0 %v1625
    %2642 = vmatprep.subr.bf16.mxu0 %v1633
    %2643 = vmatpush1.bf16.msra.mxu0 %v1632
    %2644 = vmatprep.subr.bf16.mxu0 %v1640
    %2645 = vmatpush1.bf16.msra.mxu0 %v1639
    %2646 = vmatprep.subr.bf16.mxu0 %v1647
    %2647 = vmatpush1.bf16.msra.mxu0 %v1646
    %2648 = vmatprep.subr.bf16.mxu0 %v1654
    %2649 = vmatpush1.bf16.msra.mxu0 %v1653
    %2650 = vmatprep.subr.bf16.mxu0 %v1661
    %2651 = vmatpush1.bf16.msra.mxu0 %v1660
    %2652 = vmatprep.subr.bf16.mxu0 %v1668
    %2653 = vmatpush1.bf16.msra.mxu0 %v1667
    %2654 = vmatprep.subr.bf16.mxu0 %v1675
    %2655 = vmatpush1.bf16.msra.mxu0 %v1674
    %2656 = vmatprep.subr.bf16.mxu0 %v1682
    %2657 = vmatpush1.bf16.msra.mxu0 %v1681
    %2658 = vmatprep.subr.bf16.mxu0 %v1689
    %2659 = vmatpush1.bf16.msra.mxu0 %v1688
    %2660 = vmatprep.subr.bf16.mxu0 %v1696
    %2661 = vmatpush1.bf16.msra.mxu0 %v1695
    %2662 = vmatprep.subr.bf16.mxu0 %v1703
    %2663 = vmatpush1.bf16.msra.mxu0 %v1702
    %2664 = vmatprep.subr.bf16.mxu0 %v1710
    %2665 = vmatpush1.bf16.msra.mxu0 %v1709
    %2666 = vmatprep.mubr.bf16.mxu0 %v87
    %2667 = vmatmul.mubr.bf16.gmra.mrb[0].mxu0 %v86
    %v2668 = vpop.f32.mrb[0].mxu0
    %v2669 = vadd.f32 %v506, %v2668
    %v2670 = vpop.f32.mrb[0].mxu0
    %v2671 = vadd.f32 %v510, %v2670
    %v2672 = vpop.f32.mrb[0].mxu0
    %v2673 = vadd.f32 %v506, %v2672
    %v2674 = vpop.f32.mrb[0].mxu0
    %v2675 = vadd.f32 %v510, %v2674
    %2676 = vdwg.mxu0
    %2677 = vmatprep.subr.bf16.mxu0 %v1717
    %2678 = vmatpush1.bf16.msra.mxu0 %v1716
    %2679 = vmatprep.subr.bf16.mxu0 %v1724
    %2680 = vmatpush1.bf16.msra.mxu0 %v1723
    %2681 = vmatprep.subr.bf16.mxu0 %v1731
    %2682 = vmatpush1.bf16.msra.mxu0 %v1730
    %2683 = vmatprep.subr.bf16.mxu0 %v1738
    %2684 = vmatpush1.bf16.msra.mxu0 %v1737
    %2685 = vmatprep.subr.bf16.mxu0 %v1745
    %2686 = vmatpush1.bf16.msra.mxu0 %v1744
    %2687 = vmatprep.subr.bf16.mxu0 %v1752
    %2688 = vmatpush1.bf16.msra.mxu0 %v1751
    %2689 = vmatprep.subr.bf16.mxu0 %v1759
    %2690 = vmatpush1.bf16.msra.mxu0 %v1758
    %2691 = vmatprep.subr.bf16.mxu0 %v1766
    %2692 = vmatpush1.bf16.msra.mxu0 %v1765
    %2693 = vmatprep.subr.bf16.mxu0 %v1773
    %2694 = vmatpush1.bf16.msra.mxu0 %v1772
    %2695 = vmatprep.subr.bf16.mxu0 %v1780
    %2696 = vmatpush1.bf16.msra.mxu0 %v1779
    %2697 = vmatprep.subr.bf16.mxu0 %v1787
    %2698 = vmatpush1.bf16.msra.mxu0 %v1786
    %2699 = vmatprep.subr.bf16.mxu0 %v1794
    %2700 = vmatpush1.bf16.msra.mxu0 %v1793
    %2701 = vmatprep.subr.bf16.mxu0 %v1801
    %2702 = vmatpush1.bf16.msra.mxu0 %v1800
    %2703 = vmatprep.subr.bf16.mxu0 %v1808
    %2704 = vmatpush1.bf16.msra.mxu0 %v1807
    %2705 = vmatprep.subr.bf16.mxu0 %v1815
    %2706 = vmatpush1.bf16.msra.mxu0 %v1814
    %2707 = vmatprep.subr.bf16.mxu0 %v1822
    %2708 = vmatpush1.bf16.msra.mxu0 %v1821
    %2709 = vmatprep.mubr.bf16.mxu0 %v89
    %2710 = vmatmul.mubr.bf16.gmra.mrb[0].mxu0 %v88
    %v2711 = vpop.f32.mrb[0].mxu0
    %v2712 = vadd.f32 %v2669, %v2711
    %v2713 = vpop.f32.mrb[0].mxu0
    %v2714 = vadd.f32 %v2671, %v2713
    %v2715 = vpop.f32.mrb[0].mxu0
    %v2716 = vadd.f32 %v2673, %v2715
    %v2717 = vpop.f32.mrb[0].mxu0
    %v2718 = vadd.f32 %v2675, %v2717
    %2719 = vdwg.mxu0
    %2720 = vmatprep.subr.bf16.mxu0 %v1829
    %2721 = vmatpush1.bf16.msra.mxu0 %v1828
    %2722 = vmatprep.subr.bf16.mxu0 %v1836
    %2723 = vmatpush1.bf16.msra.mxu0 %v1835
    %2724 = vmatprep.subr.bf16.mxu0 %v1843
    %2725 = vmatpush1.bf16.msra.mxu0 %v1842
    %2726 = vmatprep.subr.bf16.mxu0 %v1850
    %2727 = vmatpush1.bf16.msra.mxu0 %v1849
    %2728 = vmatprep.subr.bf16.mxu0 %v1857
    %2729 = vmatpush1.bf16.msra.mxu0 %v1856
    %2730 = vmatprep.subr.bf16.mxu0 %v1864
    %2731 = vmatpush1.bf16.msra.mxu0 %v1863
    %2732 = vmatprep.subr.bf16.mxu0 %v1871
    %2733 = vmatpush1.bf16.msra.mxu0 %v1870
    %2734 = vmatprep.subr.bf16.mxu0 %v1878
    %2735 = vmatpush1.bf16.msra.mxu0 %v1877
    %2736 = vmatprep.subr.bf16.mxu0 %v1885
    %2737 = vmatpush1.bf16.msra.mxu0 %v1884
    %2738 = vmatprep.subr.bf16.mxu0 %v1892
    %2739 = vmatpush1.bf16.msra.mxu0 %v1891
    %2740 = vmatprep.subr.bf16.mxu0 %v1899
    %2741 = vmatpush1.bf16.msra.mxu0 %v1898
    %2742 = vmatprep.subr.bf16.mxu0 %v1906
    %2743 = vmatpush1.bf16.msra.mxu0 %v1905
    %2744 = vmatprep.subr.bf16.mxu0 %v1913
    %2745 = vmatpush1.bf16.msra.mxu0 %v1912
    %2746 = vmatprep.subr.bf16.mxu0 %v1920
    %2747 = vmatpush1.bf16.msra.mxu0 %v1919
    %2748 = vmatprep.subr.bf16.mxu0 %v1927
    %2749 = vmatpush1.bf16.msra.mxu0 %v1926
    %2750 = vmatprep.subr.bf16.mxu0 %v1934
    %2751 = vmatpush1.bf16.msra.mxu0 %v1933
    %2752 = vmatprep.mubr.bf16.mxu0 %v91
    %2753 = vmatmul.mubr.bf16.gmra.mrb[0].mxu0 %v90
    %v2754 = vpop.f32.mrb[0].mxu0
    %v2755 = vadd.f32 %v2712, %v2754
    %v2756 = vpop.f32.mrb[0].mxu0
    %v2757 = vadd.f32 %v2714, %v2756
    %v2758 = vpop.f32.mrb[0].mxu0
    %v2759 = vadd.f32 %v2716, %v2758
    %v2760 = vpop.f32.mrb[0].mxu0
    %v2761 = vadd.f32 %v2718, %v2760
    %2762 = vdwg.mxu0
    %2763 = vmatprep.subr.bf16.mxu0 %v1941
    %2764 = vmatpush1.bf16.msra.mxu0 %v1940
    %2765 = vmatprep.subr.bf16.mxu0 0
    %2766 = vmatpush1.bf16.msra.mxu0 0
    %2767 = vmatprep.subr.bf16.mxu0 0
    %2768 = vmatpush1.bf16.msra.mxu0 0
    %2769 = vmatprep.subr.bf16.mxu0 0
    %2770 = vmatpush1.bf16.msra.mxu0 0
    %2771 = vmatprep.subr.bf16.mxu0 0
    %2772 = vmatpush1.bf16.msra.mxu0 0
    %2773 = vmatprep.subr.bf16.mxu0 0
    %2774 = vmatpush1.bf16.msra.mxu0 0
    %2775 = vmatprep.subr.bf16.mxu0 0
    %2776 = vmatpush1.bf16.msra.mxu0 0
    %2777 = vmatprep.subr.bf16.mxu0 0
    %2778 = vmatpush1.bf16.msra.mxu0 0
    %2779 = vmatprep.subr.bf16.mxu0 0
    %2780 = vmatpush1.bf16.msra.mxu0 0
    %2781 = vmatprep.subr.bf16.mxu0 0
    %2782 = vmatpush1.bf16.msra.mxu0 0
    %2783 = vmatprep.subr.bf16.mxu0 0
    %2784 = vmatpush1.bf16.msra.mxu0 0
    %2785 = vmatprep.subr.bf16.mxu0 0
    %2786 = vmatpush1.bf16.msra.mxu0 0
    %2787 = vmatprep.subr.bf16.mxu0 0
    %2788 = vmatpush1.bf16.msra.mxu0 0
    %2789 = vmatprep.subr.bf16.mxu0 0
    %2790 = vmatpush1.bf16.msra.mxu0 0
    %2791 = vmatprep.subr.bf16.mxu0 0
    %2792 = vmatpush1.bf16.msra.mxu0 0
    %2793 = vmatprep.subr.bf16.mxu0 0
    %2794 = vmatpush1.bf16.msra.mxu0 0
    %2795 = vmatprep.mubr.bf16.mxu0 0
    %2796 = vmatmul.mubr.bf16.gmra.mrb[0].mxu0 %v2288
    %v2797 = vpop.f32.mrb[0].mxu0
    %v2798 = vadd.f32 %v2755, %v2797
    %v2799 = vpop.f32.mrb[0].mxu0
    %v2800 = vadd.f32 %v2757, %v2799
    %v2801 = vpop.f32.mrb[0].mxu0
    %v2802 = vadd.f32 %v2759, %v2801
    %v2803 = vpop.f32.mrb[0].mxu0
    %v2804 = vadd.f32 %v2761, %v2803
    %2805 = vdwg.mxu0
    %2806 = vmatprep.subr.bf16.mxu0 0
    %2807 = vmatpush1.bf16.msra.mxu0 %v1606
    %2808 = vmatprep.subr.bf16.mxu0 0
    %2809 = vmatpush1.bf16.msra.mxu0 %v1613
    %2810 = vmatprep.subr.bf16.mxu0 0
    %2811 = vmatpush1.bf16.msra.mxu0 %v1620
    %2812 = vmatprep.subr.bf16.mxu0 0
    %2813 = vmatpush1.bf16.msra.mxu0 %v1627
    %2814 = vmatprep.subr.bf16.mxu0 0
    %2815 = vmatpush1.bf16.msra.mxu0 %v1634
    %2816 = vmatprep.subr.bf16.mxu0 0
    %2817 = vmatpush1.bf16.msra.mxu0 %v1641
    %2818 = vmatprep.subr.bf16.mxu0 0
    %2819 = vmatpush1.bf16.msra.mxu0 %v1648
    %2820 = vmatprep.subr.bf16.mxu0 0
    %2821 = vmatpush1.bf16.msra.mxu0 %v1655
    %2822 = vmatprep.subr.bf16.mxu0 0
    %2823 = vmatpush1.bf16.msra.mxu0 %v1662
    %2824 = vmatprep.subr.bf16.mxu0 0
    %2825 = vmatpush1.bf16.msra.mxu0 %v1669
    %2826 = vmatprep.subr.bf16.mxu0 0
    %2827 = vmatpush1.bf16.msra.mxu0 %v1676
    %2828 = vmatprep.subr.bf16.mxu0 0
    %2829 = vmatpush1.bf16.msra.mxu0 %v1683
    %2830 = vmatprep.subr.bf16.mxu0 0
    %2831 = vmatpush1.bf16.msra.mxu0 %v1690
    %2832 = vmatprep.subr.bf16.mxu0 0
    %2833 = vmatpush1.bf16.msra.mxu0 %v1697
    %2834 = vmatprep.subr.bf16.mxu0 0
    %2835 = vmatpush1.bf16.msra.mxu0 %v1704
    %2836 = vmatprep.subr.bf16.mxu0 0
    %2837 = vmatpush1.bf16.msra.mxu0 %v1711
    %2838 = vmatprep.mubr.bf16.mxu0 %v87
    %2839 = vmatmul.mubr.bf16.gmra.mrb[0].mxu0 %v86
    %v2840 = vpop.f32.mrb[0].mxu0
    %v2841 = vadd.f32 %v514, %v2840
    %v2842 = vpop.f32.mrb[0].mxu0
    %v2843 = vpop.f32.mrb[0].mxu0
    %v2844 = vadd.f32 %v514, %v2843
    %v2845 = vpop.f32.mrb[0].mxu0
    %2846 = vdwg.mxu0
    %2847 = vmatprep.subr.bf16.mxu0 0
    %2848 = vmatpush1.bf16.msra.mxu0 %v1718
    %2849 = vmatprep.subr.bf16.mxu0 0
    %2850 = vmatpush1.bf16.msra.mxu0 %v1725
    %2851 = vmatprep.subr.bf16.mxu0 0
    %2852 = vmatpush1.bf16.msra.mxu0 %v1732
    %2853 = vmatprep.subr.bf16.mxu0 0
    %2854 = vmatpush1.bf16.msra.mxu0 %v1739
    %2855 = vmatprep.subr.bf16.mxu0 0
    %2856 = vmatpush1.bf16.msra.mxu0 %v1746
    %2857 = vmatprep.subr.bf16.mxu0 0
    %2858 = vmatpush1.bf16.msra.mxu0 %v1753
    %2859 = vmatprep.subr.bf16.mxu0 0
    %2860 = vmatpush1.bf16.msra.mxu0 %v1760
    %2861 = vmatprep.subr.bf16.mxu0 0
    %2862 = vmatpush1.bf16.msra.mxu0 %v1767
    %2863 = vmatprep.subr.bf16.mxu0 0
    %2864 = vmatpush1.bf16.msra.mxu0 %v1774
    %2865 = vmatprep.subr.bf16.mxu0 0
    %2866 = vmatpush1.bf16.msra.mxu0 %v1781
    %2867 = vmatprep.subr.bf16.mxu0 0
    %2868 = vmatpush1.bf16.msra.mxu0 %v1788
    %2869 = vmatprep.subr.bf16.mxu0 0
    %2870 = vmatpush1.bf16.msra.mxu0 %v1795
    %2871 = vmatprep.subr.bf16.mxu0 0
    %2872 = vmatpush1.bf16.msra.mxu0 %v1802
    %2873 = vmatprep.subr.bf16.mxu0 0
    %2874 = vmatpush1.bf16.msra.mxu0 %v1809
    %2875 = vmatprep.subr.bf16.mxu0 0
    %2876 = vmatpush1.bf16.msra.mxu0 %v1816
    %2877 = vmatprep.subr.bf16.mxu0 0
    %2878 = vmatpush1.bf16.msra.mxu0 %v1823
    %2879 = vmatprep.mubr.bf16.mxu0 %v89
    %2880 = vmatmul.mubr.bf16.gmra.mrb[0].mxu0 %v88
    %v2881 = vpop.f32.mrb[0].mxu0
    %v2882 = vadd.f32 %v2841, %v2881
    %v2883 = vpop.f32.mrb[0].mxu0
    %v2884 = vpop.f32.mrb[0].mxu0
    %v2885 = vadd.f32 %v2844, %v2884
    %v2886 = vpop.f32.mrb[0].mxu0
    %2887 = vdwg.mxu0
    %2888 = vmatprep.subr.bf16.mxu0 0
    %2889 = vmatpush1.bf16.msra.mxu0 %v1830
    %2890 = vmatprep.subr.bf16.mxu0 0
    %2891 = vmatpush1.bf16.msra.mxu0 %v1837
    %2892 = vmatprep.subr.bf16.mxu0 0
    %2893 = vmatpush1.bf16.msra.mxu0 %v1844
    %2894 = vmatprep.subr.bf16.mxu0 0
    %2895 = vmatpush1.bf16.msra.mxu0 %v1851
    %2896 = vmatprep.subr.bf16.mxu0 0
    %2897 = vmatpush1.bf16.msra.mxu0 %v1858
    %2898 = vmatprep.subr.bf16.mxu0 0
    %2899 = vmatpush1.bf16.msra.mxu0 %v1865
    %2900 = vmatprep.subr.bf16.mxu0 0
    %2901 = vmatpush1.bf16.msra.mxu0 %v1872
    %2902 = vmatprep.subr.bf16.mxu0 0
    %2903 = vmatpush1.bf16.msra.mxu0 %v1879
    %2904 = vmatprep.subr.bf16.mxu0 0
    %2905 = vmatpush1.bf16.msra.mxu0 %v1886
    %2906 = vmatprep.subr.bf16.mxu0 0
    %2907 = vmatpush1.bf16.msra.mxu0 %v1893
    %2908 = vmatprep.subr.bf16.mxu0 0
    %2909 = vmatpush1.bf16.msra.mxu0 %v1900
    %2910 = vmatprep.subr.bf16.mxu0 0
    %2911 = vmatpush1.bf16.msra.mxu0 %v1907
    %2912 = vmatprep.subr.bf16.mxu0 0
    %2913 = vmatpush1.bf16.msra.mxu0 %v1914
    %2914 = vmatprep.subr.bf16.mxu0 0
    %2915 = vmatpush1.bf16.msra.mxu0 %v1921
    %2916 = vmatprep.subr.bf16.mxu0 0
    %2917 = vmatpush1.bf16.msra.mxu0 %v1928
    %2918 = vmatprep.subr.bf16.mxu0 0
    %2919 = vmatpush1.bf16.msra.mxu0 %v1935
    %2920 = vmatprep.mubr.bf16.mxu0 %v91
    %2921 = vmatmul.mubr.bf16.gmra.mrb[0].mxu0 %v90
    %v2922 = vpop.f32.mrb[0].mxu0
    %v2923 = vadd.f32 %v2882, %v2922
    %v2924 = vpop.f32.mrb[0].mxu0
    %v2925 = vpop.f32.mrb[0].mxu0
    %v2926 = vadd.f32 %v2885, %v2925
    %v2927 = vpop.f32.mrb[0].mxu0
    %2928 = vdwg.mxu0
    %2929 = vmatprep.subr.bf16.mxu0 0
    %2930 = vmatpush1.bf16.msra.mxu0 %v1942
    %2931 = vmatprep.subr.bf16.mxu0 0
    %2932 = vmatpush1.bf16.msra.mxu0 0
    %2933 = vmatprep.subr.bf16.mxu0 0
    %2934 = vmatpush1.bf16.msra.mxu0 0
    %2935 = vmatprep.subr.bf16.mxu0 0
    %2936 = vmatpush1.bf16.msra.mxu0 0
    %2937 = vmatprep.subr.bf16.mxu0 0
    %2938 = vmatpush1.bf16.msra.mxu0 0
    %2939 = vmatprep.subr.bf16.mxu0 0
    %2940 = vmatpush1.bf16.msra.mxu0 0
    %2941 = vmatprep.subr.bf16.mxu0 0
    %2942 = vmatpush1.bf16.msra.mxu0 0
    %2943 = vmatprep.subr.bf16.mxu0 0
    %2944 = vmatpush1.bf16.msra.mxu0 0
    %2945 = vmatprep.subr.bf16.mxu0 0
    %2946 = vmatpush1.bf16.msra.mxu0 0
    %2947 = vmatprep.subr.bf16.mxu0 0
    %2948 = vmatpush1.bf16.msra.mxu0 0
    %2949 = vmatprep.subr.bf16.mxu0 0
    %2950 = vmatpush1.bf16.msra.mxu0 0
    %2951 = vmatprep.subr.bf16.mxu0 0
    %2952 = vmatpush1.bf16.msra.mxu0 0
    %2953 = vmatprep.subr.bf16.mxu0 0
    %2954 = vmatpush1.bf16.msra.mxu0 0
    %2955 = vmatprep.subr.bf16.mxu0 0
    %2956 = vmatpush1.bf16.msra.mxu0 0
    %2957 = vmatprep.subr.bf16.mxu0 0
    %2958 = vmatpush1.bf16.msra.mxu0 0
    %2959 = vmatprep.subr.bf16.mxu0 0
    %2960 = vmatpush1.bf16.msra.mxu0 0
    %2961 = vmatprep.mubr.bf16.mxu0 0
    %2962 = vmatmul.mubr.bf16.gmra.mrb[0].mxu0 %v2288
    %v2963 = vpop.f32.mrb[0].mxu0
    %v2964 = vadd.f32 %v2923, %v2963
    %v2965 = vpop.f32.mrb[0].mxu0
    %v2966 = vpop.f32.mrb[0].mxu0
    %v2967 = vadd.f32 %v2926, %v2966
    %v2968 = vpop.f32.mrb[0].mxu0
    %2969 = vdwg.mxu0
    %v2970 = vmax.f32 %v2454, 0.0
    %v2971 = vmax.f32 %v2456, 0.0
    %v2972 = vmax.f32 %v2626, 0.0
    %v2973 = vmax.f32 %v2628, 0.0
    %v2974 = vmax.f32 %v2798, 0.0
    %v2975 = vmax.f32 %v2800, 0.0
    %v2976 = vmax.f32 %v2964, 0.0
    %v2977 = vmax.f32 %v2458, 0.0
    %v2978 = vmax.f32 %v2460, 0.0
    %v2979 = vmax.f32 %v2630, 0.0
    %v2980 = vmax.f32 %v2632, 0.0
    %v2981 = vmax.f32 %v2802, 0.0
    %v2982 = vmax.f32 %v2804, 0.0
    %v2983 = vmax.f32 %v2967, 0.0
    %v2984 = vpack.c.bf16 %v2977, %v2970
    %v2985 = vpack.c.bf16 %v2978, %v2971
    %v2986 = vpack.c.bf16 %v2979, %v2972
    %v2987 = vpack.c.bf16 %v2980, %v2973
    %v2988 = vpack.c.bf16 %v2981, %v2974
    %v2989 = vpack.c.bf16 %v2982, %v2975
    %v2990 = vpack.c.bf16 %v2983, %v2976
    %v2991 = vld [vmem:[#allocation6] sm:$0xf]
    %v2992 = vld [vmem:[#allocation6 + $0x4] sm:$0xf]
    %v2993 = vld [vmem:[#allocation6 + $0x8] sm:$0xf]
    %v2994 = vld [vmem:[#allocation6 + $0xc] sm:$0xf]
    %v2995 = vld [vmem:[#allocation6 + $0x10] sm:$0xf]
    %v2996 = vld [vmem:[#allocation6 + $0x14] sm:$0xf]
    %v2997 = vld [vmem:[#allocation6 + $0x18] sm:$0xf]
    %v2998 = vld [vmem:[#allocation6 + $0x1c] sm:$0xf]
    %v2999 = vld [vmem:[#allocation6 + $0x20] sm:$0xf]
    %v3000 = vld [vmem:[#allocation6 + $0x24] sm:$0xf]
    %v3001 = vld [vmem:[#allocation6 + $0x28] sm:$0xf]
    %v3002 = vld [vmem:[#allocation6 + $0x2c] sm:$0xf]
    %v3003 = vld [vmem:[#allocation6 + $0x30] sm:$0xf]
    %v3004 = vld [vmem:[#allocation6 + $0x34] sm:$0xf]
    %v3005 = vld [vmem:[#allocation6 + $0x38] sm:$0xf]
    %v3006 = vld [vmem:[#allocation6 + $0x3c] sm:$0xf]
    %v3007 = vld [vmem:[#allocation6 + $0x40] sm:$0xf]
    %v3008 = vld [vmem:[#allocation6 + $0x44] sm:$0xf]
    %v3009 = vld [vmem:[#allocation6 + $0x48] sm:$0xf]
    %v3010 = vld [vmem:[#allocation6 + $0x4c] sm:$0xf]
    %v3011 = vld [vmem:[#allocation6 + $0x50] sm:$0xf]
    %v3012 = vld [vmem:[#allocation6 + $0x54] sm:$0xf]
    %v3013 = vld [vmem:[#allocation6 + $0x58] sm:$0xf]
    %v3014 = vld [vmem:[#allocation6 + $0x5c] sm:$0xf]
    %v3015 = vld [vmem:[#allocation6 + $0x60] sm:$0xf]
    %v3016 = vld [vmem:[#allocation6 + $0x64] sm:$0xf]
    %v3017 = vld [vmem:[#allocation6 + $0x68] sm:$0xf]
    %v3018 = vld [vmem:[#allocation6 + $0x6c] sm:$0xf]
    %v3019 = vld [vmem:[#allocation6 + $0x70] sm:$0xf]
    %v3020 = vld [vmem:[#allocation6 + $0x74] sm:$0xf]
    %v3021 = vld [vmem:[#allocation6 + $0x78] sm:$0xf]
    %v3022 = vld [vmem:[#allocation6 + $0x7c] sm:$0xf]
    %v3023 = vld [vmem:[#allocation6 + $0x80] sm:$0xf]
    %v3024 = vld [vmem:[#allocation6 + $0x84] sm:$0xf]
    %v3025 = vld [vmem:[#allocation6 + $0x88] sm:$0xf]
    %v3026 = vld [vmem:[#allocation6 + $0x8c] sm:$0xf]
    %v3027 = vld [vmem:[#allocation6 + $0x90] sm:$0xf]
    %v3028 = vld [vmem:[#allocation6 + $0x94] sm:$0xf]
    %v3029 = vld [vmem:[#allocation6 + $0x98] sm:$0xf]
    %v3030 = vld [vmem:[#allocation6 + $0x9c] sm:$0xf]
    %v3031 = vld [vmem:[#allocation6 + $0xa0] sm:$0xf]
    %v3032 = vld [vmem:[#allocation6 + $0xa4] sm:$0xf]
    %v3033 = vld [vmem:[#allocation6 + $0xa8] sm:$0xf]
    %v3034 = vld [vmem:[#allocation6 + $0xac] sm:$0xf]
    %v3035 = vld [vmem:[#allocation6 + $0xb0] sm:$0xf]
    %v3036 = vld [vmem:[#allocation6 + $0xb4] sm:$0xf]
    %v3037 = vld [vmem:[#allocation6 + $0xb8] sm:$0xf]
    %v3038 = vld [vmem:[#allocation6 + $0xbc] sm:$0xf]
    %v3039 = vld [vmem:[#allocation6 + $0xc0] sm:$0xf]
    %v3040 = vld [vmem:[#allocation6 + $0xc4] sm:$0xf]
    %v3041 = vld [vmem:[#allocation6 + $0xc8] sm:$0xf]
    %v3042 = vld [vmem:[#allocation6 + $0xcc] sm:$0xf]
    %v3043 = vld [vmem:[#allocation6 + $0xd0] sm:$0xf]
    %v3044 = vld [vmem:[#allocation6 + $0xd4] sm:$0xf]
    %v3045 = vld [vmem:[#allocation6 + $0xd8] sm:$0xf]
    %v3046 = vld [vmem:[#allocation6 + $0xdc] sm:$0xf]
    %v3047 = vld [vmem:[#allocation6 + $0xe0] sm:$0xf]
    %v3048 = vld [vmem:[#allocation6 + $0xe4] sm:$0xf]
    %v3049 = vld [vmem:[#allocation6 + $0xe8] sm:$0xf]
    %v3050 = vld [vmem:[#allocation6 + $0xec] sm:$0xf]
    %v3051 = vld [vmem:[#allocation6 + $0xf0] sm:$0xf]
    %v3052 = vld [vmem:[#allocation6 + $0xf4] sm:$0xf]
    %v3053 = vld [vmem:[#allocation6 + $0xf8] sm:$0xf]
    %v3054 = vld [vmem:[#allocation6 + $0xfc] sm:$0xf]
    %v3055 = vld [vmem:[#allocation6 + $0x100] sm:$0xf]
    %v3056 = vld [vmem:[#allocation6 + $0x104] sm:$0xf]
    %v3057 = vld [vmem:[#allocation6 + $0x108] sm:$0xf]
    %v3058 = vld [vmem:[#allocation6 + $0x10c] sm:$0xf]
    %v3059 = vld [vmem:[#allocation6 + $0x110] sm:$0xf]
    %v3060 = vld [vmem:[#allocation6 + $0x114] sm:$0xf]
    %v3061 = vld [vmem:[#allocation6 + $0x118] sm:$0xf]
    %v3062 = vld [vmem:[#allocation6 + $0x11c] sm:$0xf]
    %v3063 = vld [vmem:[#allocation6 + $0x120] sm:$0xf]
    %v3064 = vld [vmem:[#allocation6 + $0x124] sm:$0xf]
    %v3065 = vld [vmem:[#allocation6 + $0x128] sm:$0xf]
    %v3066 = vld [vmem:[#allocation6 + $0x12c] sm:$0xf]
    %v3067 = vld [vmem:[#allocation6 + $0x130] sm:$0xf]
    %v3068 = vld [vmem:[#allocation6 + $0x134] sm:$0xf]
    %v3069 = vld [vmem:[#allocation6 + $0x138] sm:$0xf]
    %v3070 = vld [vmem:[#allocation6 + $0x13c] sm:$0xf]
    %v3071 = vld [vmem:[#allocation6 + $0x140] sm:$0xf]
    %v3072 = vld [vmem:[#allocation6 + $0x144] sm:$0xf]
    %v3073 = vld [vmem:[#allocation6 + $0x148] sm:$0xf]
    %v3074 = vld [vmem:[#allocation6 + $0x14c] sm:$0xf]
    %v3075 = vld [vmem:[#allocation6 + $0x150] sm:$0xf]
    %v3076 = vld [vmem:[#allocation6 + $0x154] sm:$0xf]
    %v3077 = vld [vmem:[#allocation6 + $0x158] sm:$0xf]
    %v3078 = vld [vmem:[#allocation6 + $0x15c] sm:$0xf]
    %v3079 = vld [vmem:[#allocation6 + $0x160] sm:$0xf]
    %v3080 = vld [vmem:[#allocation6 + $0x164] sm:$0xf]
    %v3081 = vld [vmem:[#allocation6 + $0x168] sm:$0xf]
    %v3082 = vld [vmem:[#allocation6 + $0x16c] sm:$0xf]
    %v3083 = vld [vmem:[#allocation6 + $0x170] sm:$0xf]
    %v3084 = vld [vmem:[#allocation6 + $0x174] sm:$0xf]
    %v3085 = vld [vmem:[#allocation6 + $0x178] sm:$0xf]
    %v3086 = vld [vmem:[#allocation6 + $0x17c] sm:$0xf]
    %v3087 = vld [vmem:[#allocation6 + $0x180] sm:$0xf]
    %v3088 = vld [vmem:[#allocation6 + $0x184] sm:$0xf]
    %v3089 = vld [vmem:[#allocation7] sm:$0x1]
    %v3091 = vlaneseq
    %v3092 = vshrl.u32 %v3091, 7
    %v3093 = vsub.s32 0, %v3092
    %v3094 = vrot.slane %v3089, %v3093
    %v3194 = vunpack.c.l.b16 %v2991
    %v3195 = vunpack.c.l.b16 %v2992
    %v3196 = vunpack.c.l.b16 %v2993
    %v3197 = vunpack.c.l.b16 %v2994
    %v3198 = vunpack.c.l.b16 %v2995
    %v3199 = vunpack.c.l.b16 %v2996
    %v3200 = vunpack.c.l.b16 %v2997
    %v3201 = vunpack.c.l.b16 %v2998
    %v3202 = vunpack.c.l.b16 %v2999
    %v3203 = vunpack.c.l.b16 %v3000
    %v3204 = vunpack.c.l.b16 %v3001
    %v3205 = vunpack.c.l.b16 %v3002
    %v3206 = vunpack.c.l.b16 %v3003
    %v3207 = vunpack.c.l.b16 %v3004
    %v3208 = vunpack.c.l.b16 %v3005
    %v3209 = vunpack.c.l.b16 %v3006
    %v3210 = vunpack.c.l.b16 %v3007
    %v3211 = vunpack.c.l.b16 %v3008
    %v3212 = vunpack.c.l.b16 %v3009
    %v3213 = vunpack.c.l.b16 %v3010
    %v3214 = vunpack.c.l.b16 %v3011
    %v3215 = vunpack.c.l.b16 %v3012
    %v3216 = vunpack.c.l.b16 %v3013
    %v3217 = vunpack.c.l.b16 %v3014
    %v3218 = vunpack.c.l.b16 %v3015
    %v3219 = vunpack.c.l.b16 %v3016
    %v3220 = vunpack.c.l.b16 %v3017
    %v3221 = vunpack.c.l.b16 %v3018
    %v3222 = vunpack.c.l.b16 %v3019
    %v3223 = vunpack.c.l.b16 %v3020
    %v3224 = vunpack.c.l.b16 %v3021
    %v3225 = vunpack.c.l.b16 %v3022
    %v3226 = vunpack.c.l.b16 %v3023
    %v3227 = vunpack.c.l.b16 %v3024
    %v3228 = vunpack.c.l.b16 %v3025
    %v3229 = vunpack.c.l.b16 %v3026
    %v3230 = vunpack.c.l.b16 %v3027
    %v3231 = vunpack.c.l.b16 %v3028
    %v3232 = vunpack.c.l.b16 %v3029
    %v3233 = vunpack.c.l.b16 %v3030
    %v3234 = vunpack.c.l.b16 %v3031
    %v3235 = vunpack.c.l.b16 %v3032
    %v3236 = vunpack.c.l.b16 %v3033
    %v3237 = vunpack.c.l.b16 %v3034
    %v3238 = vunpack.c.l.b16 %v3035
    %v3239 = vunpack.c.l.b16 %v3036
    %v3240 = vunpack.c.l.b16 %v3037
    %v3241 = vunpack.c.l.b16 %v3038
    %v3242 = vunpack.c.l.b16 %v3039
    %v3243 = vunpack.c.l.b16 %v3040
    %v3244 = vunpack.c.l.b16 %v3041
    %v3245 = vunpack.c.l.b16 %v3042
    %v3246 = vunpack.c.l.b16 %v3043
    %v3247 = vunpack.c.l.b16 %v3044
    %v3248 = vunpack.c.l.b16 %v3045
    %v3249 = vunpack.c.l.b16 %v3046
    %v3250 = vunpack.c.l.b16 %v3047
    %v3251 = vunpack.c.l.b16 %v3048
    %v3252 = vunpack.c.l.b16 %v3049
    %v3253 = vunpack.c.l.b16 %v3050
    %v3254 = vunpack.c.l.b16 %v3051
    %v3255 = vunpack.c.l.b16 %v3052
    %v3256 = vunpack.c.l.b16 %v3053
    %v3257 = vunpack.c.l.b16 %v3054
    %v3258 = vunpack.c.l.b16 %v3055
    %v3259 = vunpack.c.l.b16 %v3056
    %v3260 = vunpack.c.l.b16 %v3057
    %v3261 = vunpack.c.l.b16 %v3058
    %v3262 = vunpack.c.l.b16 %v3059
    %v3263 = vunpack.c.l.b16 %v3060
    %v3264 = vunpack.c.l.b16 %v3061
    %v3265 = vunpack.c.l.b16 %v3062
    %v3266 = vunpack.c.l.b16 %v3063
    %v3267 = vunpack.c.l.b16 %v3064
    %v3268 = vunpack.c.l.b16 %v3065
    %v3269 = vunpack.c.l.b16 %v3066
    %v3270 = vunpack.c.l.b16 %v3067
    %v3271 = vunpack.c.l.b16 %v3068
    %v3272 = vunpack.c.l.b16 %v3069
    %v3273 = vunpack.c.l.b16 %v3070
    %v3274 = vunpack.c.l.b16 %v3071
    %v3275 = vunpack.c.l.b16 %v3072
    %v3276 = vunpack.c.l.b16 %v3073
    %v3277 = vunpack.c.l.b16 %v3074
    %v3278 = vunpack.c.l.b16 %v3075
    %v3279 = vunpack.c.l.b16 %v3076
    %v3280 = vunpack.c.l.b16 %v3077
    %v3281 = vunpack.c.l.b16 %v3078
    %v3282 = vunpack.c.l.b16 %v3079
    %v3283 = vunpack.c.l.b16 %v3080
    %v3284 = vunpack.c.l.b16 %v3081
    %v3285 = vunpack.c.l.b16 %v3082
    %v3286 = vunpack.c.l.b16 %v3083
    %v3287 = vunpack.c.l.b16 %v3084
    %v3288 = vunpack.c.l.b16 %v3085
    %v3289 = vunpack.c.l.b16 %v3086
    %v3290 = vunpack.c.l.b16 %v3087
    %v3291 = vunpack.c.l.b16 %v3088
    %v3292 = vpack.c.b16 %v3195, %v3194
    %v3293 = vpack.c.b16 %v3197, %v3196
    %v3294 = vpack.c.b16 %v3199, %v3198
    %v3295 = vpack.c.b16 %v3201, %v3200
    %v3296 = vpack.c.b16 %v3203, %v3202
    %v3297 = vpack.c.b16 %v3205, %v3204
    %v3298 = vpack.c.b16 %v3207, %v3206
    %v3299 = vpack.c.b16 %v3209, %v3208
    %v3300 = vpack.c.b16 %v3211, %v3210
    %v3301 = vpack.c.b16 %v3213, %v3212
    %v3302 = vpack.c.b16 %v3215, %v3214
    %v3303 = vpack.c.b16 %v3217, %v3216
    %v3304 = vpack.c.b16 %v3219, %v3218
    %v3305 = vpack.c.b16 %v3221, %v3220
    %v3306 = vpack.c.b16 %v3223, %v3222
    %v3307 = vpack.c.b16 %v3225, %v3224
    %v3308 = vpack.c.b16 %v3227, %v3226
    %v3309 = vpack.c.b16 %v3229, %v3228
    %v3310 = vpack.c.b16 %v3231, %v3230
    %v3311 = vpack.c.b16 %v3233, %v3232
    %v3312 = vpack.c.b16 %v3235, %v3234
    %v3313 = vpack.c.b16 %v3237, %v3236
    %v3314 = vpack.c.b16 %v3239, %v3238
    %v3315 = vpack.c.b16 %v3241, %v3240
    %v3316 = vpack.c.b16 %v3243, %v3242
    %v3317 = vpack.c.b16 %v3245, %v3244
    %v3318 = vpack.c.b16 %v3247, %v3246
    %v3319 = vpack.c.b16 %v3249, %v3248
    %v3320 = vpack.c.b16 %v3251, %v3250
    %v3321 = vpack.c.b16 %v3253, %v3252
    %v3322 = vpack.c.b16 %v3255, %v3254
    %v3323 = vpack.c.b16 %v3257, %v3256
    %v3324 = vpack.c.b16 %v3259, %v3258
    %v3325 = vpack.c.b16 %v3261, %v3260
    %v3326 = vpack.c.b16 %v3263, %v3262
    %v3327 = vpack.c.b16 %v3265, %v3264
    %v3328 = vpack.c.b16 %v3267, %v3266
    %v3329 = vpack.c.b16 %v3269, %v3268
    %v3330 = vpack.c.b16 %v3271, %v3270
    %v3331 = vpack.c.b16 %v3273, %v3272
    %v3332 = vpack.c.b16 %v3275, %v3274
    %v3333 = vpack.c.b16 %v3277, %v3276
    %v3334 = vpack.c.b16 %v3279, %v3278
    %v3335 = vpack.c.b16 %v3281, %v3280
    %v3336 = vpack.c.b16 %v3283, %v3282
    %v3337 = vpack.c.b16 %v3285, %v3284
    %v3338 = vpack.c.b16 %v3287, %v3286
    %v3339 = vpack.c.b16 %v3289, %v3288
    %v3340 = vpack.c.b16 %v3291, %v3290
    %v3391 = vsel %vm2286, %v2990, 0
    %3393 = vmatprep.subr.bf16.mxu0 0
    %3394 = vmatpush1.bf16.msra.mxu0 %v3292
    %3395 = vmatprep.subr.bf16.mxu0 0
    %3396 = vmatpush1.bf16.msra.mxu0 %v3293
    %3397 = vmatprep.subr.bf16.mxu0 0
    %3398 = vmatpush1.bf16.msra.mxu0 %v3294
    %3399 = vmatprep.subr.bf16.mxu0 0
    %3400 = vmatpush1.bf16.msra.mxu0 %v3295
    %3401 = vmatprep.subr.bf16.mxu0 0
    %3402 = vmatpush1.bf16.msra.mxu0 %v3296
    %3403 = vmatprep.subr.bf16.mxu0 0
    %3404 = vmatpush1.bf16.msra.mxu0 %v3297
    %3405 = vmatprep.subr.bf16.mxu0 0
    %3406 = vmatpush1.bf16.msra.mxu0 %v3298
    %3407 = vmatprep.subr.bf16.mxu0 0
    %3408 = vmatpush1.bf16.msra.mxu0 %v3299
    %3409 = vmatprep.subr.bf16.mxu0 0
    %3410 = vmatpush1.bf16.msra.mxu0 %v3300
    %3411 = vmatprep.subr.bf16.mxu0 0
    %3412 = vmatpush1.bf16.msra.mxu0 %v3301
    %3413 = vmatprep.subr.bf16.mxu0 0
    %3414 = vmatpush1.bf16.msra.mxu0 %v3302
    %3415 = vmatprep.subr.bf16.mxu0 0
    %3416 = vmatpush1.bf16.msra.mxu0 %v3303
    %3417 = vmatprep.subr.bf16.mxu0 0
    %3418 = vmatpush1.bf16.msra.mxu0 %v3304
    %3419 = vmatprep.subr.bf16.mxu0 0
    %3420 = vmatpush1.bf16.msra.mxu0 %v3305
    %3421 = vmatprep.subr.bf16.mxu0 0
    %3422 = vmatpush1.bf16.msra.mxu0 %v3306
    %3423 = vmatprep.subr.bf16.mxu0 0
    %3424 = vmatpush1.bf16.msra.mxu0 %v3307
    %3425 = vmatprep.mubr.bf16.mxu0 %v2985
    %3426 = vmatmul.mubr.bf16.gmra.mrb[0].mxu0 %v2984
    %v3427 = vpop.f32.mrb[0].mxu0
    %v3428 = vadd.f32 %v3094, %v3427
    %v3429 = vpop.f32.mrb[0].mxu0
    %v3430 = vpop.f32.mrb[0].mxu0
    %v3431 = vadd.f32 %v3094, %v3430
    %v3432 = vpop.f32.mrb[0].mxu0
    %3433 = vdwg.mxu0
    %3434 = vmatprep.subr.bf16.mxu0 0
    %3435 = vmatpush1.bf16.msra.mxu0 %v3308
    %3436 = vmatprep.subr.bf16.mxu0 0
    %3437 = vmatpush1.bf16.msra.mxu0 %v3309
    %3438 = vmatprep.subr.bf16.mxu0 0
    %3439 = vmatpush1.bf16.msra.mxu0 %v3310
    %3440 = vmatprep.subr.bf16.mxu0 0
    %3441 = vmatpush1.bf16.msra.mxu0 %v3311
    %3442 = vmatprep.subr.bf16.mxu0 0
    %3443 = vmatpush1.bf16.msra.mxu0 %v3312
    %3444 = vmatprep.subr.bf16.mxu0 0
    %3445 = vmatpush1.bf16.msra.mxu0 %v3313
    %3446 = vmatprep.subr.bf16.mxu0 0
    %3447 = vmatpush1.bf16.msra.mxu0 %v3314
    %3448 = vmatprep.subr.bf16.mxu0 0
    %3449 = vmatpush1.bf16.msra.mxu0 %v3315
    %3450 = vmatprep.subr.bf16.mxu0 0
    %3451 = vmatpush1.bf16.msra.mxu0 %v3316
    %3452 = vmatprep.subr.bf16.mxu0 0
    %3453 = vmatpush1.bf16.msra.mxu0 %v3317
    %3454 = vmatprep.subr.bf16.mxu0 0
    %3455 = vmatpush1.bf16.msra.mxu0 %v3318
    %3456 = vmatprep.subr.bf16.mxu0 0
    %3457 = vmatpush1.bf16.msra.mxu0 %v3319
    %3458 = vmatprep.subr.bf16.mxu0 0
    %3459 = vmatpush1.bf16.msra.mxu0 %v3320
    %3460 = vmatprep.subr.bf16.mxu0 0
    %3461 = vmatpush1.bf16.msra.mxu0 %v3321
    %3462 = vmatprep.subr.bf16.mxu0 0
    %3463 = vmatpush1.bf16.msra.mxu0 %v3322
    %3464 = vmatprep.subr.bf16.mxu0 0
    %3465 = vmatpush1.bf16.msra.mxu0 %v3323
    %3466 = vmatprep.mubr.bf16.mxu0 %v2987
    %3467 = vmatmul.mubr.bf16.gmra.mrb[0].mxu0 %v2986
    %v3468 = vpop.f32.mrb[0].mxu0
    %v3469 = vadd.f32 %v3428, %v3468
    %v3470 = vpop.f32.mrb[0].mxu0
    %v3471 = vpop.f32.mrb[0].mxu0
    %v3472 = vadd.f32 %v3431, %v3471
    %v3473 = vpop.f32.mrb[0].mxu0
    %3474 = vdwg.mxu0
    %3475 = vmatprep.subr.bf16.mxu0 0
    %3476 = vmatpush1.bf16.msra.mxu0 %v3324
    %3477 = vmatprep.subr.bf16.mxu0 0
    %3478 = vmatpush1.bf16.msra.mxu0 %v3325
    %3479 = vmatprep.subr.bf16.mxu0 0
    %3480 = vmatpush1.bf16.msra.mxu0 %v3326
    %3481 = vmatprep.subr.bf16.mxu0 0
    %3482 = vmatpush1.bf16.msra.mxu0 %v3327
    %3483 = vmatprep.subr.bf16.mxu0 0
    %3484 = vmatpush1.bf16.msra.mxu0 %v3328
    %3485 = vmatprep.subr.bf16.mxu0 0
    %3486 = vmatpush1.bf16.msra.mxu0 %v3329
    %3487 = vmatprep.subr.bf16.mxu0 0
    %3488 = vmatpush1.bf16.msra.mxu0 %v3330
    %3489 = vmatprep.subr.bf16.mxu0 0
    %3490 = vmatpush1.bf16.msra.mxu0 %v3331
    %3491 = vmatprep.subr.bf16.mxu0 0
    %3492 = vmatpush1.bf16.msra.mxu0 %v3332
    %3493 = vmatprep.subr.bf16.mxu0 0
    %3494 = vmatpush1.bf16.msra.mxu0 %v3333
    %3495 = vmatprep.subr.bf16.mxu0 0
    %3496 = vmatpush1.bf16.msra.mxu0 %v3334
    %3497 = vmatprep.subr.bf16.mxu0 0
    %3498 = vmatpush1.bf16.msra.mxu0 %v3335
    %3499 = vmatprep.subr.bf16.mxu0 0
    %3500 = vmatpush1.bf16.msra.mxu0 %v3336
    %3501 = vmatprep.subr.bf16.mxu0 0
    %3502 = vmatpush1.bf16.msra.mxu0 %v3337
    %3503 = vmatprep.subr.bf16.mxu0 0
    %3504 = vmatpush1.bf16.msra.mxu0 %v3338
    %3505 = vmatprep.subr.bf16.mxu0 0
    %3506 = vmatpush1.bf16.msra.mxu0 %v3339
    %3507 = vmatprep.mubr.bf16.mxu0 %v2989
    %3508 = vmatmul.mubr.bf16.gmra.mrb[0].mxu0 %v2988
    %v3509 = vpop.f32.mrb[0].mxu0
    %v3510 = vadd.f32 %v3469, %v3509
    %v3511 = vpop.f32.mrb[0].mxu0
    %v3512 = vpop.f32.mrb[0].mxu0
    %v3513 = vadd.f32 %v3472, %v3512
    %v3514 = vpop.f32.mrb[0].mxu0
    %3515 = vdwg.mxu0
    %3516 = vmatprep.subr.bf16.mxu0 0
    %3517 = vmatpush1.bf16.msra.mxu0 %v3340
    %3518 = vmatprep.subr.bf16.mxu0 0
    %3519 = vmatpush1.bf16.msra.mxu0 0
    %3520 = vmatprep.subr.bf16.mxu0 0
    %3521 = vmatpush1.bf16.msra.mxu0 0
    %3522 = vmatprep.subr.bf16.mxu0 0
    %3523 = vmatpush1.bf16.msra.mxu0 0
    %3524 = vmatprep.subr.bf16.mxu0 0
    %3525 = vmatpush1.bf16.msra.mxu0 0
    %3526 = vmatprep.subr.bf16.mxu0 0
    %3527 = vmatpush1.bf16.msra.mxu0 0
    %3528 = vmatprep.subr.bf16.mxu0 0
    %3529 = vmatpush1.bf16.msra.mxu0 0
    %3530 = vmatprep.subr.bf16.mxu0 0
    %3531 = vmatpush1.bf16.msra.mxu0 0
    %3532 = vmatprep.subr.bf16.mxu0 0
    %3533 = vmatpush1.bf16.msra.mxu0 0
    %3534 = vmatprep.subr.bf16.mxu0 0
    %3535 = vmatpush1.bf16.msra.mxu0 0
    %3536 = vmatprep.subr.bf16.mxu0 0
    %3537 = vmatpush1.bf16.msra.mxu0 0
    %3538 = vmatprep.subr.bf16.mxu0 0
    %3539 = vmatpush1.bf16.msra.mxu0 0
    %3540 = vmatprep.subr.bf16.mxu0 0
    %3541 = vmatpush1.bf16.msra.mxu0 0
    %3542 = vmatprep.subr.bf16.mxu0 0
    %3543 = vmatpush1.bf16.msra.mxu0 0
    %3544 = vmatprep.subr.bf16.mxu0 0
    %3545 = vmatpush1.bf16.msra.mxu0 0
    %3546 = vmatprep.subr.bf16.mxu0 0
    %3547 = vmatpush1.bf16.msra.mxu0 0
    %3548 = vmatprep.mubr.bf16.mxu0 0
    %3549 = vmatmul.mubr.bf16.gmra.mrb[0].mxu0 %v3391
    %v3550 = vpop.f32.mrb[0].mxu0
    %v3551 = vadd.f32 %v3510, %v3550
    %v3552 = vpop.f32.mrb[0].mxu0
    %v3553 = vpop.f32.mrb[0].mxu0
    %v3554 = vadd.f32 %v3513, %v3553
    %v3555 = vpop.f32.mrb[0].mxu0
    %3556 = vdwg.mxu0
    %v3557 = vpack.c.bf16 %v3554, %v3551
    %v3559 = vunpack.c.l.b16 %v3557
    %v3560 = vunpack.c.h.b16 %v3557
    %v3561 = vpack.c.b16 %v3559, %v3559
    %v3562 = vpack.c.b16 %v3560, %v3560
    %3565 = vst [vmem:[#allocation9] sm:$0xf] %v3561
    %3566 = vst [vmem:[#allocation9 + $0x4] sm:$0xf] %v3562
    // Predicated region
    $region38: #{predictor_forward.1} parent=1 // pred_check
      _
    $region39: #{predictor_forward.1} parent=1 // pred_check_branch
      %3568 = sbr.rel (0) target = $region41
    $region40: #{predictor_forward.1} parent=1 // pred_region
      // Predicated region
      $region42: #{predictor_forward.1} parent=40 // pred_check
        _
      $region43: #{predictor_forward.1} parent=40 // pred_check_branch
        %3570 = sbr.rel (0) target = $region45
      $region44: #{predictor_forward.1} parent=40 // pred_region
        // Predicated region
        $region46: #{predictor_forward.1} parent=44 // pred_check
          _
        $region47: #{predictor_forward.1} parent=44 // pred_check_branch
          %3572 = sbr.rel target = $region49
        $region48: #{predictor_forward.1} parent=44 // pred_region
          // Predicated region
          $region61: #{predictor_forward.1} parent=48 // pred_check
            _
          $region62: #{predictor_forward.1} parent=48 // pred_check_branch
            %3587 = sbr.rel (0) target = $region64
          $region63: #{predictor_forward.1} parent=48 // pred_region
            loop: start=0, step=1, limit=1
            $region65: #{predictor_forward.1} parent=63 // loop_pre_header
              _
            $region66: #{predictor_forward.1} parent=63 // loop_header
              %s3590 = sphi 0, %s3594
              %p3591 = scmp.ge.s32.totalorder %s3590, 1
              %s3595 = sphi [#allocation9], [#allocation9]
              %s3596 = sphi %s5, %s5
            $region67: #{predictor_forward.1} parent=63 // loop_header_branch
              %3593 = sbr.rel (%p3591) target = $region71
            $region68: #{predictor_forward.1} parent=63 // loop_body
              %v3597 = vld [vmem:[%s3595] sm:$0xf]
              %3598 = vst [vmem:[%s3596] sm:$0xf] %v3597
            $region69: #{predictor_forward.1} parent=63 // loop_footer
              %s3594 = sadd.s32 1, %s3590
            $region70: #{predictor_forward.1} parent=63 // loop_footer_branch
              %3589 = sbr.rel target = $region66
            $region71: #{predictor_forward.1} parent=63 // loop_exit
              _
          $region64: #{predictor_forward.1} parent=48 // pred_fallthru
            _
        $region49: #{predictor_forward.1} parent=44 // pred_fallthru
          _
        // Predicated region
        $region50: #{predictor_forward.1} parent=44 // pred_check
          _
        $region51: #{predictor_forward.1} parent=44 // pred_check_branch
          %3574 = sbr.rel (0) target = $region53
        $region52: #{predictor_forward.1} parent=44 // pred_region
          loop: start=0, step=1, limit=1
          $region54: #{predictor_forward.1} parent=52 // loop_pre_header
            _
          $region55: #{predictor_forward.1} parent=52 // loop_header
            %s3577 = sphi 0, %s3581
            %p3578 = scmp.ge.s32.totalorder %s3577, 1
            %s3582 = sphi [#allocation9], [#allocation9]
            %s3583 = sphi %s5, %s5
          $region56: #{predictor_forward.1} parent=52 // loop_header_branch
            %3580 = sbr.rel (%p3578) target = $region60
          $region57: #{predictor_forward.1} parent=52 // loop_body
            %v3584 = vld [vmem:[%s3582] sm:$0xf]
            %3585 = vst [vmem:[%s3583] sm:$0xf] %v3584
          $region58: #{predictor_forward.1} parent=52 // loop_footer
            %s3581 = sadd.s32 1, %s3577
          $region59: #{predictor_forward.1} parent=52 // loop_footer_branch
            %3576 = sbr.rel target = $region55
          $region60: #{predictor_forward.1} parent=52 // loop_exit
            _
        $region53: #{predictor_forward.1} parent=44 // pred_fallthru
          _
      $region45: #{predictor_forward.1} parent=40 // pred_fallthru
        _
      %3599 = vnop
    $region41: #{predictor_forward.1} parent=1 // pred_fallthru
      _
    // Predicated region
    $region72: #{predictor_forward.1} parent=1 // pred_check
      _
    $region73: #{predictor_forward.1} parent=1 // pred_check_branch
      %3601 = sbr.rel (0) target = $region75
    $region74: #{predictor_forward.1} parent=1 // pred_region
      _
    $region75: #{predictor_forward.1} parent=1 // pred_fallthru
      _
    %3602 = vsyncpa [#allocation3], 1
    %3603 = vsyncpa [#allocation5], 1
    %3604 = vsyncpa [#allocation8], 1

</llo_original>
